<compile_context>
chip_gen: v5e
topology: v5e:2x2
jax: 0.10.0
libtpu: 0.0.40
codegen_flags: <defaults>
</compile_context>

<pallas_src>
import functools

import jax
import jax.numpy as jnp
from jax import lax
from jax.experimental import pallas as pl
from jax.experimental.pallas import tpu as pltpu

KERNEL_SIZES = (3, 4, 5)
K_MAX = max(KERNEL_SIZES)                    # 5 taps in the shared im2col window
PAD_L = max(k // 2 for k in KERNEL_SIZES)    # = 2 (shared left zero padding)
PAD_R = K_MAX - PAD_L                        # = 3 (right padding so t=L window exists)


def _branch_len(L, k):
    # PyTorch Conv1d output length with padding = k // 2.
    return L + 2 * (k // 2) - k + 1


def _round_up(a, m):
    return -(-a // m) * m


def _text_model_kernel(x_ref, w_ref, b_ref, wo_ref, bo_ref, out_ref, *,
                       seq_len, hidden_size):
    """One batch tile of the fused 3-branch text-CNN head.

    x_ref  : (TB, L + K_MAX, E)   bf16  masked embeddings, shared zero padding
    w_ref  : (K_MAX*E, H3p)       bf16  all conv taps fused along K and N
    b_ref  : (1, H3p)             f32   conv biases (added after time-max)
    wo_ref : (H3p, Cp)            f32   output Linear weight (zero padded)
    bo_ref : (1, Cp)              f32   output Linear bias   (zero padded)
    out_ref: (TB, Cp)             f32   lane-dense logits slab
    """
    L = seq_len
    H = hidden_size
    x = x_ref[...]                                   # (TB, Lp, E) bf16, no upcast
    TB, Lp, E = x.shape
    Lo = L + 1                                       # longest branch (even k = 4)

    # im2col along the contraction dim: K_MAX shifted windows on the lane axis.
    cols = jnp.concatenate(
        [x[:, j:j + Lo, :] for j in range(K_MAX)], axis=-1)     # (TB, Lo, K_MAX*E)
    cols2 = cols.reshape(TB * Lo, K_MAX * E)                    # 2D, large M

    # Single bf16 MXU matmul covering every tap of every branch (f32 accum).
    conv = jnp.dot(cols2, w_ref[...],
                   preferred_element_type=jnp.float32)          # (TB*Lo, H3p)
    H3p = conv.shape[-1]
    conv = conv.reshape(TB, Lo, H3p)

    # Time max.  Positions 0..L-1 are valid for every branch; position L only
    # exists for branches whose Conv1d output length is L+1 (here k = 4).
    m_main = jnp.max(conv[:, :L, :], axis=1)                    # (TB, H3p)
    last = conv[:, L, :]                                        # (TB, H3p)
    col = lax.broadcasted_iota(jnp.int32, (1, H3p), 1)
    use_last = jnp.zeros((1, H3p), jnp.bool_)
    for bi, k in enumerate(KERNEL_SIZES):
        if _branch_len(L, k) == Lo:
            use_last = use_last | ((col >= bi * H) & (col < (bi + 1) * H))
    feat = jnp.where(use_last, jnp.maximum(m_main, last), m_main)

    # Conv bias is constant over time -> add after the max, then ReLU.
    feat = jnp.maximum(feat + b_ref[...], 0.0)                  # (TB, H3p)

    # TODO(synk): nn.Dropout(0.2) is stochastic in train mode; identity (eval) here.

    out_ref[...] = (jnp.dot(feat, wo_ref[...],
                            preferred_element_type=jnp.float32) + bo_ref[...])


def text_model_forward(params, inputs, masks):
    """TextModel forward; the heavy per-tile compute runs in the Pallas kernel."""
    B, L = inputs.shape
    E = params["embedding"].shape[-1]
    H = params["conv3_b"].shape[0]
    C = params["out_b"].shape[0]
    H3 = len(KERNEL_SIZES) * H
    H3p = _round_up(H3, 128)                     # fused conv output width (lane dense)
    Cp = _round_up(max(C, 1), 128)               # lane-dense logits width
    K5 = K_MAX * E
    Lp = L + K_MAX                               # = L + PAD_L + PAD_R
    Lo = L + 1

    # --- glue: gather + mask + bf16 cast + shared pad (one fused XLA pass) ---
    # TODO(synk): the embedding gather could move in-kernel (scalar-prefetched
    # token ids + DMA row gather) to drop this HBM round trip entirely.
    emb = params["embedding"][inputs]                            # (B, L, E) f32
    x = (emb * masks.astype(emb.dtype)[..., None]).astype(jnp.bfloat16)
    x = jnp.pad(x, ((0, 0), (PAD_L, PAD_R), (0, 0)))             # (B, Lp, E)

    # --- fused conv weights: (K_MAX*E, 3H padded) with per-branch tap offsets ---
    w_fused = jnp.zeros((K5, H3p), jnp.float32)
    b_fused = jnp.zeros((1, H3p), jnp.float32)
    for bi, k in enumerate(KERNEL_SIZES):
        off = PAD_L - k // 2                                     # tap offset in window
        wk = jnp.transpose(params[f"conv{k}_w"], (2, 1, 0))      # (k, E, H)
        w_fused = w_fused.at[off * E:(off + k) * E,
                             bi * H:(bi + 1) * H].set(wk.reshape(k * E, H))
        b_fused = b_fused.at[0, bi * H:(bi + 1) * H].set(params[f"conv{k}_b"])
    w_fused = w_fused.astype(jnp.bfloat16)                       # native MXU path

    wo = jnp.zeros((H3p, Cp), jnp.float32)
    wo = wo.at[:H3, :C].set(params["out_w"].T)                   # torch Linear: (C, 3H)
    bo = jnp.zeros((1, Cp), jnp.float32).at[0, :C].set(params["out_b"])

    # --- batch tiling: ~20 MiB of per-row residents, >= 2 grid steps (v7x) ---
    bytes_per_row = (2 * 2 * Lp * E            # bf16 x tile, double buffered
                     + 2 * Lo * K5             # bf16 im2col copy
                     + 4 * Lo * H3p            # f32 conv temp
                     + 2 * 4 * Cp              # f32 out tile, double buffered
                     + 4 * 4 * H3p)            # small f32 row temps
    tb_cap = max(8, int((20 * 1024 * 1024) // bytes_per_row) // 8 * 8)
    half_b = _round_up(max(-(-B // 2), 1), 8)
    TB = int(max(8, min(tb_cap, 256, half_b)))
    B_pad = max(_round_up(B, TB), 2 * TB)
    if B_pad != B:
        x = jnp.pad(x, ((0, B_pad - B), (0, 0), (0, 0)))         # zero rows, dropped later

    kernel = functools.partial(_text_model_kernel, seq_len=L, hidden_size=H)
    out = pl.pallas_call(
        kernel,
        out_shape=jax.ShapeDtypeStruct((B_pad, Cp), jnp.float32),
        grid=(B_pad // TB,),
        in_specs=[
            pl.BlockSpec((TB, Lp, E), lambda i: (i, 0, 0)),
            pl.BlockSpec((K5, H3p), lambda i: (0, 0)),
            pl.BlockSpec((1, H3p), lambda i: (0, 0)),
            pl.BlockSpec((H3p, Cp), lambda i: (0, 0)),
            pl.BlockSpec((1, Cp), lambda i: (0, 0)),
        ],
        out_specs=pl.BlockSpec((TB, Cp), lambda i: (i, 0)),
        compiler_params=pltpu.CompilerParams(
            dimension_semantics=("parallel",),
            vmem_limit_bytes=32 * 1024 * 1024,   # v7x-safe; v5e/v6e have headroom
        ),
    )(x, w_fused, b_fused, wo, bo)

    out = out[:B, :C]
    if C == 1:                                                   # matches .squeeze(dim=1)
        out = jnp.squeeze(out, axis=1)
    return out


def init_params(key, num_embeddings, num_classes, embedding_size, hidden_size):
    keys = jax.random.split(key, 1 + 2 * len(KERNEL_SIZES) + 2)
    params = {
        # nn.Embedding weight, normal(mean=0, std=0.01)
        "embedding": 0.01 * jax.random.normal(
            keys[0], (num_embeddings, embedding_size), jnp.float32),
    }
    idx = 1
    for k in KERNEL_SIZES:
        fan_in = embedding_size * k
        bound = 1.0 / jnp.sqrt(fan_in)
        params[f"conv{k}_w"] = jax.random.uniform(
            keys[idx], (hidden_size, embedding_size, k), jnp.float32, -bound, bound)
        params[f"conv{k}_b"] = jax.random.uniform(
            keys[idx + 1], (hidden_size,), jnp.float32, -bound, bound)
        idx += 2
    fan_in = len(KERNEL_SIZES) * hidden_size
    bound = 1.0 / jnp.sqrt(fan_in)
    params["out_w"] = jax.random.uniform(
        keys[idx], (num_classes, fan_in), jnp.float32, -bound, bound)
    params["out_b"] = jax.random.uniform(
        keys[idx + 1], (num_classes,), jnp.float32, -bound, bound)
    return params


if __name__ == "__main__":
    B, L = 2, 8                      # batch, sequence length
    num_embeddings, num_classes = 100, 2
    embedding_size, hidden_size = 32, 64

    key = jax.random.PRNGKey(0)
    k_params, k_ids, k_mask = jax.random.split(key, 3)

    params = init_params(k_params, num_embeddings, num_classes,
                         embedding_size, hidden_size)
    inputs = jax.random.randint(k_ids, (B, L), 0, num_embeddings, dtype=jnp.int32)
    masks = (jax.random.uniform(k_mask, (B, L)) > 0.2).astype(jnp.float32)

    out = text_model_forward(params, inputs, masks)
    jax.block_until_ready(out)
    assert out.shape == (B, num_classes)
    print("KERNEL_OK")
</pallas_src>

<mosaic_0001>
module attributes {stable_mosaic.version = 11 : i64} {
  func.func @_text_model_kernel(%arg0: i32, %arg1: memref<8x13x32xbf16, #tpu.memory_space<vmem>>, %arg2: memref<160x256xbf16, #tpu.memory_space<vmem>>, %arg3: memref<1x256xf32, #tpu.memory_space<vmem>>, %arg4: memref<256x128xf32, #tpu.memory_space<vmem>>, %arg5: memref<1x128xf32, #tpu.memory_space<vmem>>, %arg6: memref<8x128xf32, #tpu.memory_space<vmem>>) attributes {dimension_semantics = [#tpu.dimension_semantics<parallel>], iteration_bounds = array<i64: 2>, scalar_prefetch = 0 : i64, scratch_operands = 0 : i64, tpu.core_type = #tpu.core_type<tc>, window_params = [{transform_indices = @transform_0, window_bounds = array<i64: 8, 13, 32>}, {pipeline_mode = #tpu.pipeline_mode<synchronous>, transform_indices = @transform_1, window_bounds = array<i64: 160, 256>}, {pipeline_mode = #tpu.pipeline_mode<synchronous>, transform_indices = @transform_2, window_bounds = array<i64: 1, 256>}, {pipeline_mode = #tpu.pipeline_mode<synchronous>, transform_indices = @transform_3, window_bounds = array<i64: 256, 128>}, {pipeline_mode = #tpu.pipeline_mode<synchronous>, transform_indices = @transform_4, window_bounds = array<i64: 1, 128>}, {transform_indices = @transform_5, window_bounds = array<i64: 8, 128>}]} {
    %c0 = arith.constant 0 : index
    %c0_0 = arith.constant 0 : index
    %c0_1 = arith.constant 0 : index
    %0 = vector.load %arg1[%c0, %c0_0, %c0_1] : memref<8x13x32xbf16, #tpu.memory_space<vmem>>, vector<8x13x32xbf16>
    %1 = vector.extract_strided_slice %0 {offsets = [0, 0, 0], sizes = [8, 9, 32], strides = [1, 1, 1]} : vector<8x13x32xbf16> to vector<8x9x32xbf16>
    %2 = vector.extract_strided_slice %0 {offsets = [0, 1, 0], sizes = [8, 9, 32], strides = [1, 1, 1]} : vector<8x13x32xbf16> to vector<8x9x32xbf16>
    %3 = vector.extract_strided_slice %0 {offsets = [0, 2, 0], sizes = [8, 9, 32], strides = [1, 1, 1]} : vector<8x13x32xbf16> to vector<8x9x32xbf16>
    %4 = vector.extract_strided_slice %0 {offsets = [0, 3, 0], sizes = [8, 9, 32], strides = [1, 1, 1]} : vector<8x13x32xbf16> to vector<8x9x32xbf16>
    %5 = vector.extract_strided_slice %0 {offsets = [0, 4, 0], sizes = [8, 9, 32], strides = [1, 1, 1]} : vector<8x13x32xbf16> to vector<8x9x32xbf16>
    %6 = tpu.concatenate %1, %2, %3, %4, %5 in 2 : vector<8x9x32xbf16>, vector<8x9x32xbf16>, vector<8x9x32xbf16>, vector<8x9x32xbf16>, vector<8x9x32xbf16> -> vector<8x9x160xbf16>
    %7 = vector.shape_cast %6 : vector<8x9x160xbf16> to vector<72x160xbf16>
    %c0_2 = arith.constant 0 : index
    %c0_3 = arith.constant 0 : index
    %8 = vector.load %arg2[%c0_2, %c0_3] : memref<160x256xbf16, #tpu.memory_space<vmem>>, vector<160x256xbf16>
    %cst = arith.constant dense<0.000000e+00> : vector<72x256xf32>
    %9 = tpu.matmul %7, %8, %cst {dimension_numbers = #tpu.dot_dimension_numbers<[1], [0], [0], [1], [0, 0, 1, 1], [], []>} : vector<72x160xbf16>, vector<160x256xbf16>, vector<72x256xf32> -> vector<72x256xf32>
    %10 = vector.shape_cast %9 : vector<72x256xf32> to vector<8x9x256xf32>
    %11 = vector.extract_strided_slice %10 {offsets = [0, 0, 0], sizes = [8, 8, 256], strides = [1, 1, 1]} : vector<8x9x256xf32> to vector<8x8x256xf32>
    %cst_4 = arith.constant dense<0xFF800000> : vector<8x256xf32>
    %12 = vector.multi_reduction <maximumf>, %11, %cst_4 [1] : vector<8x8x256xf32> to vector<8x256xf32>
    %13 = vector.extract_strided_slice %10 {offsets = [0, 8, 0], sizes = [8, 1, 256], strides = [1, 1, 1]} : vector<8x9x256xf32> to vector<8x1x256xf32>
    %14 = vector.shape_cast %13 : vector<8x1x256xf32> to vector<8x256xf32>
    %15 = tpu.iota {dimensions = array<i32: 1>} : vector<1x256xi32>
    %false = arith.constant false
    %16 = vector.broadcast %false : i1 to vector<1x256xi1>
    %c64_i32 = arith.constant 64 : i32
    %17 = vector.broadcast %c64_i32 : i32 to vector<1x256xi32>
    %18 = arith.cmpi sge, %15, %17 : vector<1x256xi32>
    %c128_i32 = arith.constant 128 : i32
    %19 = vector.broadcast %c128_i32 : i32 to vector<1x256xi32>
    %20 = arith.cmpi slt, %15, %19 : vector<1x256xi32>
    %21 = arith.andi %18, %20 : vector<1x256xi1>
    %22 = arith.ori %16, %21 : vector<1x256xi1>
    %23 = arith.maximumf %12, %14 : vector<8x256xf32>
    %24 = vector.shape_cast %22 : vector<1x256xi1> to vector<1x256xi1>
    %25 = vector.broadcast %24 : vector<1x256xi1> to vector<8x256xi1>
    %26 = arith.select %25, %23, %12 : vector<8x256xi1>, vector<8x256xf32>
    %c0_5 = arith.constant 0 : index
    %c0_6 = arith.constant 0 : index
    %27 = vector.load %arg3[%c0_5, %c0_6] : memref<1x256xf32, #tpu.memory_space<vmem>>, vector<1x256xf32>
    %28 = vector.broadcast %27 : vector<1x256xf32> to vector<8x256xf32>
    %29 = arith.addf %26, %28 : vector<8x256xf32>
    %cst_7 = arith.constant 0.000000e+00 : f32
    %30 = vector.broadcast %cst_7 : f32 to vector<8x256xf32>
    %31 = arith.maximumf %29, %30 : vector<8x256xf32>
    %c0_8 = arith.constant 0 : index
    %c0_9 = arith.constant 0 : index
    %32 = vector.load %arg4[%c0_8, %c0_9] : memref<256x128xf32, #tpu.memory_space<vmem>>, vector<256x128xf32>
    %cst_10 = arith.constant dense<0.000000e+00> : vector<8x128xf32>
    %33 = tpu.matmul %31, %32, %cst_10 {dimension_numbers = #tpu.dot_dimension_numbers<[1], [0], [0], [1], [0, 0, 1, 1], [], []>} : vector<8x256xf32>, vector<256x128xf32>, vector<8x128xf32> -> vector<8x128xf32>
    %c0_11 = arith.constant 0 : index
    %c0_12 = arith.constant 0 : index
    %34 = vector.load %arg5[%c0_11, %c0_12] : memref<1x128xf32, #tpu.memory_space<vmem>>, vector<1x128xf32>
    %35 = vector.broadcast %34 : vector<1x128xf32> to vector<8x128xf32>
    %36 = arith.addf %33, %35 : vector<8x128xf32>
    %c0_13 = arith.constant 0 : index
    %c0_14 = arith.constant 0 : index
    %37 = vector.load %arg6[%c0_13, %c0_14] : memref<8x128xf32, #tpu.memory_space<vmem>>, vector<8x128xf32>
    tpu.vector_store %arg6[%c0_13, %c0_14], %36 {strides = array<i32>} : memref<8x128xf32, #tpu.memory_space<vmem>>, vector<8x128xf32>,
    return
  }
  func.func @transform_0(%arg0: i32) -> (i32, i32, i32) {
    %c0_i32 = arith.constant 0 : i32
    %c0_i32_0 = arith.constant 0 : i32
    %c0_i32_1 = arith.constant 0 : i32
    return %arg0, %c0_i32, %c0_i32_0 : i32, i32, i32
  }
  func.func @transform_1(%arg0: i32) -> (i32, i32) {
    %c0_i32 = arith.constant 0 : i32
    %c0_i32_0 = arith.constant 0 : i32
    %c0_i32_1 = arith.constant 0 : i32
    return %c0_i32, %c0_i32_0 : i32, i32
  }
  func.func @transform_2(%arg0: i32) -> (i32, i32) {
    %c0_i32 = arith.constant 0 : i32
    %c0_i32_0 = arith.constant 0 : i32
    %c0_i32_1 = arith.constant 0 : i32
    return %c0_i32, %c0_i32_0 : i32, i32
  }
  func.func @transform_3(%arg0: i32) -> (i32, i32) {
    %c0_i32 = arith.constant 0 : i32
    %c0_i32_0 = arith.constant 0 : i32
    %c0_i32_1 = arith.constant 0 : i32
    return %c0_i32, %c0_i32_0 : i32, i32
  }
  func.func @transform_4(%arg0: i32) -> (i32, i32) {
    %c0_i32 = arith.constant 0 : i32
    %c0_i32_0 = arith.constant 0 : i32
    %c0_i32_1 = arith.constant 0 : i32
    return %c0_i32, %c0_i32_0 : i32, i32
  }
  func.func @transform_5(%arg0: i32) -> (i32, i32) {
    %c0_i32 = arith.constant 0 : i32
    %c0_i32_0 = arith.constant 0 : i32
    return %arg0, %c0_i32 : i32, i32
  }
}

</mosaic_0001>

<llo_original>
// kernel: tpu_custom_call.1
$region0: #{tpu_custom_call.1}
  #allocation0 [shape = 'u32[]', space=smem, size = 0x4, offset = 0x4, fixed_abs, tag = 'smem constant byte address 0x4 - core index']
  #allocation1 [shape = 'u32[72,128]{1,0:T(1,128)}', space=vmem, size = 0x9000, scoped, tag = 'internal scratch']
  %s0 = inlined_call_operand.vmem [shape: bf16[16,13,32], index: 0, kind: input, shape index: {}]
  %s1 = inlined_call_operand.vmem [shape: bf16[160,256], index: 1, kind: input, shape index: {}]
  %s2 = inlined_call_operand.vmem [shape: f32[1,256], index: 2, kind: input, shape index: {}]
  %s3 = inlined_call_operand.hbm [shape: f32[256,128], index: 3, kind: input, shape index: {}]
  %s4 = inlined_call_operand.vmem [shape: f32[1,128], index: 4, kind: input, shape index: {}]
  %s5 = inlined_call_operand.hbm [shape: f32[16,128], index: 5, kind: output, shape index: {}]
  %s6 = sld [smem:[#allocation0]]
  $region57: #{tpu_custom_call.1} parent=0
    _
  %s8 = ssub.s32 1, %s6
  %s9 = scalar_select 0, %s8, %s6
  $region1: #{tpu_custom_call.1} parent=0
    #allocation2 [shape = 'u8[131072]{0}', space=vmem, size = 0x20000, scoped, tag = 'input window, operand 3, single buffered']
    #allocation3 [shape = 's32[2]{0}', space=sflag, size = 0x8, scoped, tag = 'scoped memory for tpu_custom_call.1']
    #allocation4 [shape = 's32[2]{0}', space=sflag, size = 0x8, scoped, tag = 'scoped memory for tpu_custom_call.1']
    #allocation5 [shape = 'u8[8192]{0}', space=vmem, size = 0x2000, scoped, tag = 'output window, operand 0']
    %10 = vsyncpa [#allocation3], 0
    %11 = vsyncpa [#allocation4], 0
    %s12 = scalar_lea.sflag [#allocation4], 1
    %13 = vsyncpa %s12, 0
    loop: start=0, step=1, limit=4
    $region2: #{tpu_custom_call.1} parent=1 // loop_pre_header
      _
    $region3: #{tpu_custom_call.1} parent=1 // loop_header
      %s15 = sphi 0, %s19
      %p16 = scmp.ge.s32.totalorder %s15, 4
      %s25 = sphi 0, %s27
      %s28 = sphi 0, %s25
      %s29 = sphi 0, %s28
      %s45 = sphi 0, %s29
      %s49 = sphi 0, %s49
      %s51 = sphi 0, %s49
      %s52 = sphi 0, %s51
      %s66 = sphi 0, %s52
      %s70 = sphi 0, %s70
      %s72 = sphi 0, %s70
      %s73 = sphi 0, %s72
      %s87 = sphi 0, %s73
      %s91 = sphi 0, %s91
      %s93 = sphi 0, %s91
      %s94 = sphi 0, %s93
      %s108 = sphi 0, %s94
      %s112 = sphi 0, %s112
      %s114 = sphi 0, %s112
      %s115 = sphi 0, %s114
      %s129 = sphi 0, %s115
      %s135 = sphi 0, %s137
      %s138 = sphi 0, %s135
      %s139 = sphi 0, %s138
      %s155 = sphi 0, %s139
    $region4: #{tpu_custom_call.1} parent=1 // loop_header_branch
      %18 = sbr.rel (%p16) target = $region8
    $region5: #{tpu_custom_call.1} parent=1 // loop_body
      %s20 = ssub.s32 %s15, 1
      %s21 = ssub.s32 %s15, 2
      %s22 = sadd.s32 %s15, 1
      %s23 = ssub.s32 %s15, %s22
      %p24 = scmp.eq.s32.totalorder %s23, 0
      %s26 = sadd.s32 %s25, 1
      %s27 = scalar_select %p24, %s25, %s26
      %p30 = pneg %p24
      %p31 = scmp.eq.s32.totalorder %s15, 1
      %p32 = por %p30, %p31
      %p33 = scmp.ne.s32.totalorder %s25, %s28
      %p34 = scmp.eq.s32.totalorder %s15, 0
      %p35 = por %p33, %p34
      %p36 = scmp.ne.s32.totalorder %s25, %s28
      %p37 = scmp.eq.s32.totalorder %s20, 1
      %p38 = por %p36, %p37
      %p39 = scmp.ne.s32.totalorder %s28, %s29
      %p40 = scmp.eq.s32.totalorder %s20, 0
      %p41 = por %p39, %p40
      %p42 = scmp.ne.s32.totalorder %s28, %s29
      %p43 = scmp.eq.s32.totalorder %s21, 1
      %p44 = por %p42, %p43
      %p46 = scmp.ne.s32.totalorder %s29, %s45
      %p47 = scmp.eq.s32.totalorder %s21, 0
      %p48 = por %p46, %p47
      %s50 = sadd.s32 %s49, 1
      %p53 = scmp.eq.s32.totalorder %s15, 1
      %p54 = scmp.ne.s32.totalorder %s49, %s51
      %p55 = scmp.eq.s32.totalorder %s15, 0
      %p56 = por %p54, %p55
      %p57 = scmp.ne.s32.totalorder %s49, %s51
      %p58 = scmp.eq.s32.totalorder %s20, 1
      %p59 = por %p57, %p58
      %p60 = scmp.ne.s32.totalorder %s51, %s52
      %p61 = scmp.eq.s32.totalorder %s20, 0
      %p62 = por %p60, %p61
      %p63 = scmp.ne.s32.totalorder %s51, %s52
      %p64 = scmp.eq.s32.totalorder %s21, 1
      %p65 = por %p63, %p64
      %p67 = scmp.ne.s32.totalorder %s52, %s66
      %p68 = scmp.eq.s32.totalorder %s21, 0
      %p69 = por %p67, %p68
      %s71 = sadd.s32 %s70, 1
      %p74 = scmp.eq.s32.totalorder %s15, 1
      %p75 = scmp.ne.s32.totalorder %s70, %s72
      %p76 = scmp.eq.s32.totalorder %s15, 0
      %p77 = por %p75, %p76
      %p78 = scmp.ne.s32.totalorder %s70, %s72
      %p79 = scmp.eq.s32.totalorder %s20, 1
      %p80 = por %p78, %p79
      %p81 = scmp.ne.s32.totalorder %s72, %s73
      %p82 = scmp.eq.s32.totalorder %s20, 0
      %p83 = por %p81, %p82
      %p84 = scmp.ne.s32.totalorder %s72, %s73
      %p85 = scmp.eq.s32.totalorder %s21, 1
      %p86 = por %p84, %p85
      %p88 = scmp.ne.s32.totalorder %s73, %s87
      %p89 = scmp.eq.s32.totalorder %s21, 0
      %p90 = por %p88, %p89
      %s92 = sadd.s32 %s91, 1
      %p95 = scmp.eq.s32.totalorder %s15, 1
      %p96 = scmp.ne.s32.totalorder %s91, %s93
      %p97 = scmp.eq.s32.totalorder %s15, 0
      %p98 = por %p96, %p97
      %p99 = scmp.ne.s32.totalorder %s91, %s93
      %p100 = scmp.eq.s32.totalorder %s20, 1
      %p101 = por %p99, %p100
      %p102 = scmp.ne.s32.totalorder %s93, %s94
      %p103 = scmp.eq.s32.totalorder %s20, 0
      %p104 = por %p102, %p103
      %p105 = scmp.ne.s32.totalorder %s93, %s94
      %p106 = scmp.eq.s32.totalorder %s21, 1
      %p107 = por %p105, %p106
      %p109 = scmp.ne.s32.totalorder %s94, %s108
      %p110 = scmp.eq.s32.totalorder %s21, 0
      %p111 = por %p109, %p110
      %s113 = sadd.s32 %s112, 1
      %p116 = scmp.eq.s32.totalorder %s15, 1
      %p117 = scmp.ne.s32.totalorder %s112, %s114
      %p118 = scmp.eq.s32.totalorder %s15, 0
      %p119 = por %p117, %p118
      %p120 = scmp.ne.s32.totalorder %s112, %s114
      %p121 = scmp.eq.s32.totalorder %s20, 1
      %p122 = por %p120, %p121
      %p123 = scmp.ne.s32.totalorder %s114, %s115
      %p124 = scmp.eq.s32.totalorder %s20, 0
      %p125 = por %p123, %p124
      %p126 = scmp.ne.s32.totalorder %s114, %s115
      %p127 = scmp.eq.s32.totalorder %s21, 1
      %p128 = por %p126, %p127
      %p130 = scmp.ne.s32.totalorder %s115, %s129
      %p131 = scmp.eq.s32.totalorder %s21, 0
      %p132 = por %p130, %p131
      %s133 = ssub.s32 %s15, %s22
      %p134 = scmp.eq.s32.totalorder %s133, 0
      %s136 = sadd.s32 %s135, 1
      %s137 = scalar_select %p134, %s135, %s136
      %p140 = pneg %p134
      %p141 = scmp.eq.s32.totalorder %s15, 1
      %p142 = por %p140, %p141
      %p143 = scmp.ne.s32.totalorder %s135, %s138
      %p144 = scmp.eq.s32.totalorder %s15, 0
      %p145 = por %p143, %p144
      %p146 = scmp.ne.s32.totalorder %s135, %s138
      %p147 = scmp.eq.s32.totalorder %s20, 1
      %p148 = por %p146, %p147
      %p149 = scmp.ne.s32.totalorder %s138, %s139
      %p150 = scmp.eq.s32.totalorder %s20, 0
      %p151 = por %p149, %p150
      %p152 = scmp.ne.s32.totalorder %s138, %s139
      %p153 = scmp.eq.s32.totalorder %s21, 1
      %p154 = por %p152, %p153
      %p156 = scmp.ne.s32.totalorder %s139, %s155
      %p157 = scmp.eq.s32.totalorder %s21, 0
      %p158 = por %p156, %p157
      %p159 = scmp.le.s32.totalorder 1, %s15
      %p160 = scmp.lt.s32.totalorder %s15, 3
      %p161 = pnand %p159, %p160
      %p162 = pneg %p161
      // Predicated region
      $region9: #{tpu_custom_call.1} parent=5 // pred_check
        _
      $region10: #{tpu_custom_call.1} parent=5 // pred_check_branch
        %164 = sbr.rel (%p161) target = $region12
      $region11: #{tpu_custom_call.1} parent=5 // pred_region
        %s165 = ssub.s32 %s15, 1
        // Predicated region
        $region13: #{tpu_custom_call.1} parent=11 // pred_check
          %p166 = pneg %p62
        $region14: #{tpu_custom_call.1} parent=11 // pred_check_branch
          %168 = sbr.rel (%p166) target = $region16
        $region15: #{tpu_custom_call.1} parent=11 // pred_region
          _
        $region16: #{tpu_custom_call.1} parent=11 // pred_fallthru
          _
        // Predicated region
        $region17: #{tpu_custom_call.1} parent=11 // pred_check
          %p169 = pneg %p83
        $region18: #{tpu_custom_call.1} parent=11 // pred_check_branch
          %171 = sbr.rel (%p169) target = $region20
        $region19: #{tpu_custom_call.1} parent=11 // pred_region
          _
        $region20: #{tpu_custom_call.1} parent=11 // pred_fallthru
          _
        // Predicated region
        $region21: #{tpu_custom_call.1} parent=11 // pred_check
          %p172 = pneg %p104
        $region22: #{tpu_custom_call.1} parent=11 // pred_check_branch
          %174 = sbr.rel (%p172) target = $region24
        $region23: #{tpu_custom_call.1} parent=11 // pred_region
          %176 = vsyncadd [#allocation3], 0
          %s177 = sshll.u32 %s3, 4
          %s178 = int_to_ptr.hbm [resolvable:$true] %s177
          %s179 = sshll.u32 [#allocation2], 4
          %s180 = int_to_ptr.vmem [resolvable:$true] %s179
          %185 = dma.hbm_to_vmem [thread:$0]  %s178, 4096, %s180, [#allocation3], 128, 128, 8
        $region24: #{tpu_custom_call.1} parent=11 // pred_fallthru
          _
        // Predicated region
        $region25: #{tpu_custom_call.1} parent=11 // pred_check
          %p186 = pneg %p125
        $region26: #{tpu_custom_call.1} parent=11 // pred_check_branch
          %188 = sbr.rel (%p186) target = $region28
        $region27: #{tpu_custom_call.1} parent=11 // pred_region
          _
        $region28: #{tpu_custom_call.1} parent=11 // pred_fallthru
          _
      $region12: #{tpu_custom_call.1} parent=5 // pred_fallthru
        _
      %p189 = scmp.lt.s32.totalorder %s15, 2
      // Predicated region
      $region29: #{tpu_custom_call.1} parent=5 // pred_check
        %p190 = pneg %p189
      $region30: #{tpu_custom_call.1} parent=5 // pred_check_branch
        %192 = sbr.rel (%p190) target = $region32
      $region31: #{tpu_custom_call.1} parent=5 // pred_region
        // Predicated region
        $region33: #{tpu_custom_call.1} parent=31 // pred_check
          %p193 = pneg %p35
        $region34: #{tpu_custom_call.1} parent=31 // pred_check_branch
          %195 = sbr.rel (%p193) target = $region36
        $region35: #{tpu_custom_call.1} parent=31 // pred_region
          %s196 = smul.u32 8, %s15
          %p197 = scmp.lt.s32.totalorder %s196, 15
          %s198 = scalar_select %p197, %s196, 15
          %s199 = smul.addr %s198, 2
          %s200 = smul.addr %s199, 4
          %s201 = scalar_lea.vmem %s0, %s200
          %s202 = smul.u32 8, %s15
        $region36: #{tpu_custom_call.1} parent=31 // pred_fallthru
          _
      $region32: #{tpu_custom_call.1} parent=5 // pred_fallthru
        _
      %p203 = scmp.le.s32.totalorder 1, %s15
      %p204 = scmp.lt.s32.totalorder %s15, 3
      %p205 = pnand %p203, %p204
      %p206 = pneg %p205
      // Predicated region
      $region37: #{tpu_custom_call.1} parent=5 // pred_check
        _
      $region38: #{tpu_custom_call.1} parent=5 // pred_check_branch
        %208 = sbr.rel (%p205) target = $region40
      $region39: #{tpu_custom_call.1} parent=5 // pred_region
        %s209 = ssub.s32 %s15, 1
        // Predicated region
        $region41: #{tpu_custom_call.1} parent=39 // pred_check
          %p210 = pneg %p104
        $region42: #{tpu_custom_call.1} parent=39 // pred_check_branch
          %212 = sbr.rel (%p210) target = $region44
        $region43: #{tpu_custom_call.1} parent=39 // pred_region
          %214 = dma.done [#allocation3], 4096
        $region44: #{tpu_custom_call.1} parent=39 // pred_fallthru
          _
        %s215 = smul.u32 8, %s20
        %p216 = scmp.lt.s32.totalorder %s215, 15
        %s217 = scalar_select %p216, %s215, 15
        %s218 = smul.addr %s217, 2
        %s219 = smul.addr %s218, 4
        %s220 = scalar_lea.vmem %s0, %s219
        %p221 = pneg %p41
        %p222 = pneg %p38
        %p223 = pneg %p62
        %p224 = pneg %p59
        %p225 = pneg %p83
        %p226 = pneg %p80
        %p227 = pneg %p104
        %p228 = pneg %p101
        %p229 = pneg %p125
        %p230 = pneg %p122
        %p231 = pneg %p151
        %p232 = pneg %p148
        %s233 = sand.u32 %s138, 1
        %s234 = scalar_lea.sflag [#allocation4], %s233
        %s235 = sand.u32 %s138, 1
        %s236 = smul.addr %s235, 8
        %s237 = scalar_lea.vmem [#allocation5], %s236
        %s238 = smul.u32 8, %s20
        %p239 = scmp.lt.s32.totalorder %s238, 15
        %s240 = scalar_select %p239, %s238, 15
        %s241 = smul.addr %s240, 2
        %s242 = smul.addr %s241, 4
        %s243 = scalar_lea.vmem %s0, %s242
        %s244 = smul.u32 8, %s20
        %v246 = vld [vmem:[%s243] sm:$0xf]
        %v247 = vld [vmem:[%s243 + $0x4] sm:$0x7]
        %v248 = vld [vmem:[%s243 + $0x8] sm:$0xf]
        %v249 = vld [vmem:[%s243 + $0xc] sm:$0x7]
        %v250 = vld [vmem:[%s243 + $0x10] sm:$0xf]
        %v251 = vld [vmem:[%s243 + $0x14] sm:$0x7]
        %v252 = vld [vmem:[%s243 + $0x18] sm:$0xf]
        %v253 = vld [vmem:[%s243 + $0x1c] sm:$0x7]
        %v254 = vld [vmem:[%s243 + $0x20] sm:$0xf]
        %v255 = vld [vmem:[%s243 + $0x24] sm:$0x7]
        %v256 = vld [vmem:[%s243 + $0x28] sm:$0xf]
        %v257 = vld [vmem:[%s243 + $0x2c] sm:$0x7]
        %v258 = vld [vmem:[%s243 + $0x30] sm:$0xf]
        %v259 = vld [vmem:[%s243 + $0x34] sm:$0x7]
        %v260 = vld [vmem:[%s243 + $0x38] sm:$0xf]
        %v261 = vld [vmem:[%s243 + $0x3c] sm:$0x7]
        %v278 = vunpack.c.l.b16 %v246
        %v279 = vunpack.c.l.b16 %v247
        %v280 = vunpack.c.l.b16 %v248
        %v281 = vunpack.c.l.b16 %v249
        %v282 = vunpack.c.l.b16 %v250
        %v283 = vunpack.c.l.b16 %v251
        %v284 = vunpack.c.l.b16 %v252
        %v285 = vunpack.c.l.b16 %v253
        %v286 = vunpack.c.l.b16 %v254
        %v287 = vunpack.c.l.b16 %v255
        %v288 = vunpack.c.l.b16 %v256
        %v289 = vunpack.c.l.b16 %v257
        %v290 = vunpack.c.l.b16 %v258
        %v291 = vunpack.c.l.b16 %v259
        %v292 = vunpack.c.l.b16 %v260
        %v293 = vunpack.c.l.b16 %v261
        %v294 = vpack.c.b16 %v279, %v278
        %v295 = vpack.c.b16 %v281, %v280
        %v296 = vpack.c.b16 %v283, %v282
        %v297 = vpack.c.b16 %v285, %v284
        %v298 = vpack.c.b16 %v287, %v286
        %v299 = vpack.c.b16 %v289, %v288
        %v300 = vpack.c.b16 %v291, %v290
        %v301 = vpack.c.b16 %v293, %v292
        %v303 = vshrl.u32 %v294, 16
        %v305 = vshll.u32 %v294, 16
        %v307 = vrot.slane %v305, 1
        %v308 = vor.u32 %v303, %v307
        %v310 = vshrl.u32 %v295, 16
        %v312 = vshll.u32 %v295, 16
        %v314 = vrot.slane %v312, 1
        %v315 = vor.u32 %v310, %v314
        %v317 = vshrl.u32 %v296, 16
        %v319 = vshll.u32 %v296, 16
        %v321 = vrot.slane %v319, 1
        %v322 = vor.u32 %v317, %v321
        %v324 = vshrl.u32 %v297, 16
        %v326 = vshll.u32 %v297, 16
        %v328 = vrot.slane %v326, 1
        %v329 = vor.u32 %v324, %v328
        %v331 = vshrl.u32 %v298, 16
        %v333 = vshll.u32 %v298, 16
        %v335 = vrot.slane %v333, 1
        %v336 = vor.u32 %v331, %v335
        %v338 = vshrl.u32 %v299, 16
        %v340 = vshll.u32 %v299, 16
        %v342 = vrot.slane %v340, 1
        %v343 = vor.u32 %v338, %v342
        %v345 = vshrl.u32 %v300, 16
        %v347 = vshll.u32 %v300, 16
        %v349 = vrot.slane %v347, 1
        %v350 = vor.u32 %v345, %v349
        %v352 = vshrl.u32 %v301, 16
        %v354 = vshll.u32 %v301, 16
        %v356 = vrot.slane %v354, 1
        %v357 = vor.u32 %v352, %v356
        %358 = vrot.lane.b32.xlu0 %v308, 32
        %v359 = vpop.permute.xlu0 %358
        %360 = vrot.lane.b32.xlu0 %v315, 32
        %v361 = vpop.permute.xlu0 %360
        %362 = vrot.lane.b32.xlu0 %v322, 32
        %v363 = vpop.permute.xlu0 %362
        %364 = vrot.lane.b32.xlu0 %v329, 32
        %v365 = vpop.permute.xlu0 %364
        %366 = vrot.lane.b32.xlu0 %v336, 32
        %v367 = vpop.permute.xlu0 %366
        %368 = vrot.lane.b32.xlu0 %v343, 32
        %v369 = vpop.permute.xlu0 %368
        %370 = vrot.lane.b32.xlu0 %v350, 32
        %v371 = vpop.permute.xlu0 %370
        %372 = vrot.lane.b32.xlu0 %v357, 32
        %v373 = vpop.permute.xlu0 %372
        %v374 = vrot.slane %v294, 1
        %v375 = vrot.slane %v295, 1
        %v376 = vrot.slane %v296, 1
        %v377 = vrot.slane %v297, 1
        %v378 = vrot.slane %v298, 1
        %v379 = vrot.slane %v299, 1
        %v380 = vrot.slane %v300, 1
        %v381 = vrot.slane %v301, 1
        %382 = vrot.lane.b32.xlu0 %v374, 64
        %v383 = vpop.permute.xlu0 %382
        %384 = vrot.lane.b32.xlu0 %v375, 64
        %v385 = vpop.permute.xlu0 %384
        %386 = vrot.lane.b32.xlu0 %v376, 64
        %v387 = vpop.permute.xlu0 %386
        %388 = vrot.lane.b32.xlu0 %v377, 64
        %v389 = vpop.permute.xlu0 %388
        %390 = vrot.lane.b32.xlu0 %v378, 64
        %v391 = vpop.permute.xlu0 %390
        %392 = vrot.lane.b32.xlu0 %v379, 64
        %v393 = vpop.permute.xlu0 %392
        %394 = vrot.lane.b32.xlu0 %v380, 64
        %v395 = vpop.permute.xlu0 %394
        %396 = vrot.lane.b32.xlu0 %v381, 64
        %v397 = vpop.permute.xlu0 %396
        %v398 = vrot.slane %v303, 1
        %v399 = vrot.slane %v305, 2
        %v400 = vor.u32 %v398, %v399
        %v401 = vrot.slane %v310, 1
        %v402 = vrot.slane %v312, 2
        %v403 = vor.u32 %v401, %v402
        %v404 = vrot.slane %v317, 1
        %v405 = vrot.slane %v319, 2
        %v406 = vor.u32 %v404, %v405
        %v407 = vrot.slane %v324, 1
        %v408 = vrot.slane %v326, 2
        %v409 = vor.u32 %v407, %v408
        %v410 = vrot.slane %v331, 1
        %v411 = vrot.slane %v333, 2
        %v412 = vor.u32 %v410, %v411
        %v413 = vrot.slane %v338, 1
        %v414 = vrot.slane %v340, 2
        %v415 = vor.u32 %v413, %v414
        %v416 = vrot.slane %v345, 1
        %v417 = vrot.slane %v347, 2
        %v418 = vor.u32 %v416, %v417
        %v419 = vrot.slane %v352, 1
        %v420 = vrot.slane %v354, 2
        %v421 = vor.u32 %v419, %v420
        %422 = vrot.lane.b32.xlu0 %v400, 96
        %v423 = vpop.permute.xlu0 %422
        %424 = vrot.lane.b32.xlu0 %v403, 96
        %v425 = vpop.permute.xlu0 %424
        %426 = vrot.lane.b32.xlu0 %v406, 96
        %v427 = vpop.permute.xlu0 %426
        %428 = vrot.lane.b32.xlu0 %v409, 96
        %v429 = vpop.permute.xlu0 %428
        %430 = vrot.lane.b32.xlu0 %v412, 96
        %v431 = vpop.permute.xlu0 %430
        %432 = vrot.lane.b32.xlu0 %v415, 96
        %v433 = vpop.permute.xlu0 %432
        %434 = vrot.lane.b32.xlu0 %v418, 96
        %v435 = vpop.permute.xlu0 %434
        %436 = vrot.lane.b32.xlu0 %v421, 96
        %v437 = vpop.permute.xlu0 %436
        %v438 = vrot.slane %v294, 2
        %v439 = vrot.slane %v295, 2
        %v440 = vrot.slane %v296, 2
        %v441 = vrot.slane %v297, 2
        %v442 = vrot.slane %v298, 2
        %v443 = vrot.slane %v299, 2
        %v444 = vrot.slane %v300, 2
        %v445 = vrot.slane %v301, 2
        %vm446 = vcmask 261120
        %v448 = vsel %vm446, %v294, %v359
        %v450 = vsel %vm446, %v295, %v361
        %v452 = vsel %vm446, %v296, %v363
        %v454 = vsel %vm446, %v297, %v365
        %v456 = vsel %vm446, %v298, %v367
        %v458 = vsel %vm446, %v299, %v369
        %v460 = vsel %vm446, %v300, %v371
        %v462 = vsel %vm446, %v301, %v373
        %vm463 = vcmask 523264
        %v465 = vsel %vm463, %v448, %v383
        %v467 = vsel %vm463, %v450, %v385
        %v469 = vsel %vm463, %v452, %v387
        %v471 = vsel %vm463, %v454, %v389
        %v473 = vsel %vm463, %v456, %v391
        %v475 = vsel %vm463, %v458, %v393
        %v477 = vsel %vm463, %v460, %v395
        %v479 = vsel %vm463, %v462, %v397
        %vm480 = vcmask 785408
        %v482 = vsel %vm480, %v465, %v423
        %v484 = vsel %vm480, %v467, %v425
        %v486 = vsel %vm480, %v469, %v427
        %v488 = vsel %vm480, %v471, %v429
        %v490 = vsel %vm480, %v473, %v431
        %v492 = vsel %vm480, %v475, %v433
        %v494 = vsel %vm480, %v477, %v435
        %v496 = vsel %vm480, %v479, %v437
        %v497 = vrot.slane %v438, 7
        %v498 = vrot.slane %v439, 7
        %v499 = vrot.slane %v440, 7
        %v500 = vrot.slane %v441, 7
        %v501 = vrot.slane %v442, 7
        %v502 = vrot.slane %v443, 7
        %v503 = vrot.slane %v444, 7
        %v504 = vrot.slane %v445, 7
        %vm505 = vcmask 1040384
        %v507 = vsel %vm505, %v482, %v497
        %vm509 = vcmask 1041409
        %v510 = vsel %vm509, %v482, %v497
        %v512 = vrot.slane %v510, 1
        %vm513 = vcmask 1042434
        %v514 = vsel %vm513, %v482, %v497
        %v516 = vrot.slane %v514, 2
        %vm517 = vcmask 1043459
        %v518 = vsel %vm517, %v482, %v497
        %v520 = vrot.slane %v518, 3
        %vm521 = vcmask 1044484
        %v522 = vsel %vm521, %v482, %v497
        %v524 = vrot.slane %v522, 4
        %v526 = vsel %vm505, %v484, %v498
        %v528 = vsel %vm509, %v484, %v498
        %v530 = vrot.slane %v528, 1
        %v531 = vsel %vm513, %v484, %v498
        %v533 = vrot.slane %v531, 2
        %v534 = vsel %vm517, %v484, %v498
        %v536 = vrot.slane %v534, 3
        %v537 = vsel %vm521, %v484, %v498
        %v539 = vrot.slane %v537, 4
        %v541 = vsel %vm505, %v486, %v499
        %v543 = vsel %vm509, %v486, %v499
        %v545 = vrot.slane %v543, 1
        %v546 = vsel %vm513, %v486, %v499
        %v548 = vrot.slane %v546, 2
        %v549 = vsel %vm517, %v486, %v499
        %v551 = vrot.slane %v549, 3
        %v552 = vsel %vm521, %v486, %v499
        %v554 = vrot.slane %v552, 4
        %v556 = vsel %vm505, %v488, %v500
        %v558 = vsel %vm509, %v488, %v500
        %v560 = vrot.slane %v558, 1
        %v561 = vsel %vm513, %v488, %v500
        %v563 = vrot.slane %v561, 2
        %v564 = vsel %vm517, %v488, %v500
        %v566 = vrot.slane %v564, 3
        %v567 = vsel %vm521, %v488, %v500
        %v569 = vrot.slane %v567, 4
        %v571 = vsel %vm505, %v490, %v501
        %v573 = vsel %vm509, %v490, %v501
        %v575 = vrot.slane %v573, 1
        %v576 = vsel %vm513, %v490, %v501
        %v578 = vrot.slane %v576, 2
        %v579 = vsel %vm517, %v490, %v501
        %v581 = vrot.slane %v579, 3
        %v582 = vsel %vm521, %v490, %v501
        %v584 = vrot.slane %v582, 4
        %v586 = vsel %vm505, %v492, %v502
        %v588 = vsel %vm509, %v492, %v502
        %v590 = vrot.slane %v588, 1
        %v591 = vsel %vm513, %v492, %v502
        %v593 = vrot.slane %v591, 2
        %v594 = vsel %vm517, %v492, %v502
        %v596 = vrot.slane %v594, 3
        %v597 = vsel %vm521, %v492, %v502
        %v599 = vrot.slane %v597, 4
        %v601 = vsel %vm505, %v494, %v503
        %v603 = vsel %vm509, %v494, %v503
        %v605 = vrot.slane %v603, 1
        %v606 = vsel %vm513, %v494, %v503
        %v608 = vrot.slane %v606, 2
        %v609 = vsel %vm517, %v494, %v503
        %v611 = vrot.slane %v609, 3
        %v612 = vsel %vm521, %v494, %v503
        %v614 = vrot.slane %v612, 4
        %v616 = vsel %vm505, %v496, %v504
        %v618 = vsel %vm509, %v496, %v504
        %v620 = vrot.slane %v618, 1
        %v621 = vsel %vm513, %v496, %v504
        %v623 = vrot.slane %v621, 2
        %v624 = vsel %vm517, %v496, %v504
        %v626 = vrot.slane %v624, 3
        %v627 = vsel %vm521, %v496, %v504
        %v629 = vrot.slane %v627, 4
        %v630 = vunpack.i.l.s16 %v507
        %v631 = vunpack.i.h.s16 %v507
        %v632 = vunpack.i.l.s16 %v512
        %v633 = vunpack.i.h.s16 %v512
        %v634 = vunpack.i.l.s16 %v516
        %v635 = vunpack.i.h.s16 %v516
        %v636 = vunpack.i.l.s16 %v520
        %v637 = vunpack.i.h.s16 %v520
        %v638 = vunpack.i.l.s16 %v524
        %v639 = vunpack.i.l.s16 %v526
        %v640 = vunpack.i.h.s16 %v526
        %v641 = vunpack.i.l.s16 %v530
        %v642 = vunpack.i.h.s16 %v530
        %v643 = vunpack.i.l.s16 %v533
        %v644 = vunpack.i.h.s16 %v533
        %v645 = vunpack.i.l.s16 %v536
        %v646 = vunpack.i.h.s16 %v536
        %v647 = vunpack.i.l.s16 %v539
        %v648 = vunpack.i.l.s16 %v541
        %v649 = vunpack.i.h.s16 %v541
        %v650 = vunpack.i.l.s16 %v545
        %v651 = vunpack.i.h.s16 %v545
        %v652 = vunpack.i.l.s16 %v548
        %v653 = vunpack.i.h.s16 %v548
        %v654 = vunpack.i.l.s16 %v551
        %v655 = vunpack.i.h.s16 %v551
        %v656 = vunpack.i.l.s16 %v554
        %v657 = vunpack.i.l.s16 %v556
        %v658 = vunpack.i.h.s16 %v556
        %v659 = vunpack.i.l.s16 %v560
        %v660 = vunpack.i.h.s16 %v560
        %v661 = vunpack.i.l.s16 %v563
        %v662 = vunpack.i.h.s16 %v563
        %v663 = vunpack.i.l.s16 %v566
        %v664 = vunpack.i.h.s16 %v566
        %v665 = vunpack.i.l.s16 %v569
        %v666 = vunpack.i.l.s16 %v571
        %v667 = vunpack.i.h.s16 %v571
        %v668 = vunpack.i.l.s16 %v575
        %v669 = vunpack.i.h.s16 %v575
        %v670 = vunpack.i.l.s16 %v578
        %v671 = vunpack.i.h.s16 %v578
        %v672 = vunpack.i.l.s16 %v581
        %v673 = vunpack.i.h.s16 %v581
        %v674 = vunpack.i.l.s16 %v584
        %v675 = vunpack.i.l.s16 %v586
        %v676 = vunpack.i.h.s16 %v586
        %v677 = vunpack.i.l.s16 %v590
        %v678 = vunpack.i.h.s16 %v590
        %v679 = vunpack.i.l.s16 %v593
        %v680 = vunpack.i.h.s16 %v593
        %v681 = vunpack.i.l.s16 %v596
        %v682 = vunpack.i.h.s16 %v596
        %v683 = vunpack.i.l.s16 %v599
        %v684 = vunpack.i.l.s16 %v601
        %v685 = vunpack.i.h.s16 %v601
        %v686 = vunpack.i.l.s16 %v605
        %v687 = vunpack.i.h.s16 %v605
        %v688 = vunpack.i.l.s16 %v608
        %v689 = vunpack.i.h.s16 %v608
        %v690 = vunpack.i.l.s16 %v611
        %v691 = vunpack.i.h.s16 %v611
        %v692 = vunpack.i.l.s16 %v614
        %v693 = vunpack.i.l.s16 %v616
        %v694 = vunpack.i.h.s16 %v616
        %v695 = vunpack.i.l.s16 %v620
        %v696 = vunpack.i.h.s16 %v620
        %v697 = vunpack.i.l.s16 %v623
        %v698 = vunpack.i.h.s16 %v623
        %v699 = vunpack.i.l.s16 %v626
        %v700 = vunpack.i.h.s16 %v626
        %v701 = vunpack.i.l.s16 %v629
        %v702 = vld [vmem:[%s1] sm:$0xff]
        %v703 = vld [vmem:[%s1 + $0x8] sm:$0xff]
        %v704 = vld [vmem:[%s1 + $0x10] sm:$0xff]
        %v705 = vld [vmem:[%s1 + $0x18] sm:$0xff]
        %v706 = vld [vmem:[%s1 + $0x20] sm:$0xff]
        %v707 = vld [vmem:[%s1 + $0x28] sm:$0xff]
        %v708 = vld [vmem:[%s1 + $0x30] sm:$0xff]
        %v709 = vld [vmem:[%s1 + $0x38] sm:$0xff]
        %v710 = vld [vmem:[%s1 + $0x40] sm:$0xff]
        %v711 = vld [vmem:[%s1 + $0x48] sm:$0xff]
        %v712 = vld [vmem:[%s1 + $0x50] sm:$0xff]
        %v713 = vld [vmem:[%s1 + $0x58] sm:$0xff]
        %v714 = vld [vmem:[%s1 + $0x60] sm:$0xff]
        %v715 = vld [vmem:[%s1 + $0x68] sm:$0xff]
        %v716 = vld [vmem:[%s1 + $0x70] sm:$0xff]
        %v717 = vld [vmem:[%s1 + $0x78] sm:$0xff]
        %v718 = vld [vmem:[%s1 + $0x80] sm:$0xff]
        %v719 = vld [vmem:[%s1 + $0x88] sm:$0xff]
        %v720 = vld [vmem:[%s1 + $0x90] sm:$0xff]
        %v721 = vld [vmem:[%s1 + $0x98] sm:$0xff]
        %v722 = vpack.i.b16 %v631, %v630
        %v723 = vpack.i.b16 %v633, %v632
        %v724 = vpack.i.b16 %v635, %v634
        %v725 = vpack.i.b16 %v637, %v636
        %v726 = vpack.i.b16 %v639, %v638
        %v727 = vpack.i.b16 %v641, %v640
        %v728 = vpack.i.b16 %v643, %v642
        %v729 = vpack.i.b16 %v645, %v644
        %v730 = vpack.i.b16 %v647, %v646
        %v731 = vpack.i.b16 %v649, %v648
        %v732 = vpack.i.b16 %v651, %v650
        %v733 = vpack.i.b16 %v653, %v652
        %v734 = vpack.i.b16 %v655, %v654
        %v735 = vpack.i.b16 %v657, %v656
        %v736 = vpack.i.b16 %v659, %v658
        %v737 = vpack.i.b16 %v661, %v660
        %v738 = vpack.i.b16 %v663, %v662
        %v739 = vpack.i.b16 %v665, %v664
        %v740 = vpack.i.b16 %v667, %v666
        %v741 = vpack.i.b16 %v669, %v668
        %v742 = vpack.i.b16 %v671, %v670
        %v743 = vpack.i.b16 %v673, %v672
        %v744 = vpack.i.b16 %v675, %v674
        %v745 = vpack.i.b16 %v677, %v676
        %v746 = vpack.i.b16 %v679, %v678
        %v747 = vpack.i.b16 %v681, %v680
        %v748 = vpack.i.b16 %v683, %v682
        %v749 = vpack.i.b16 %v685, %v684
        %v750 = vpack.i.b16 %v687, %v686
        %v751 = vpack.i.b16 %v689, %v688
        %v752 = vpack.i.b16 %v691, %v690
        %v753 = vpack.i.b16 %v693, %v692
        %v754 = vpack.i.b16 %v695, %v694
        %v755 = vpack.i.b16 %v697, %v696
        %v756 = vpack.i.b16 %v699, %v698
        %v757 = vpack.i.b16 %v701, %v700
        %759 = vst [vmem:[#allocation1] ss:$9 sm:$0xff] %v722
        %s761 = scalar_lea.vmem [#allocation1], 1
        %762 = vst [vmem:[%s761] ss:$9 sm:$0xff] %v723
        %s764 = scalar_lea.vmem [#allocation1], 2
        %765 = vst [vmem:[%s764] ss:$9 sm:$0xff] %v724
        %s767 = scalar_lea.vmem [#allocation1], 3
        %768 = vst [vmem:[%s767] ss:$9 sm:$0xff] %v725
        %s770 = scalar_lea.vmem [#allocation1], 4
        %771 = vst [vmem:[%s770] ss:$9 sm:$0xff] %v726
        %s773 = scalar_lea.vmem [#allocation1], 5
        %774 = vst [vmem:[%s773] ss:$9 sm:$0xff] %v727
        %s776 = scalar_lea.vmem [#allocation1], 6
        %777 = vst [vmem:[%s776] ss:$9 sm:$0xff] %v728
        %s779 = scalar_lea.vmem [#allocation1], 7
        %780 = vst [vmem:[%s779] ss:$9 sm:$0xff] %v729
        %v781 = vld [vmem:[#allocation1] sm:$0xff]
        %v782 = vld [vmem:[#allocation1 + $0x9] sm:$0xff]
        %784 = vst [vmem:[#allocation1] ss:$9 sm:$0xff] %v730
        %786 = vst [vmem:[%s761] ss:$9 sm:$0xff] %v731
        %788 = vst [vmem:[%s764] ss:$9 sm:$0xff] %v732
        %790 = vst [vmem:[%s767] ss:$9 sm:$0xff] %v733
        %792 = vst [vmem:[%s770] ss:$9 sm:$0xff] %v734
        %794 = vst [vmem:[%s773] ss:$9 sm:$0xff] %v735
        %796 = vst [vmem:[%s776] ss:$9 sm:$0xff] %v736
        %798 = vst [vmem:[%s779] ss:$9 sm:$0xff] %v737
        %v799 = vld [vmem:[#allocation1] sm:$0xff]
        %v800 = vld [vmem:[#allocation1 + $0x9] sm:$0xff]
        %802 = vst [vmem:[#allocation1] ss:$9 sm:$0xff] %v738
        %804 = vst [vmem:[%s761] ss:$9 sm:$0xff] %v739
        %806 = vst [vmem:[%s764] ss:$9 sm:$0xff] %v740
        %808 = vst [vmem:[%s767] ss:$9 sm:$0xff] %v741
        %810 = vst [vmem:[%s770] ss:$9 sm:$0xff] %v742
        %812 = vst [vmem:[%s773] ss:$9 sm:$0xff] %v743
        %814 = vst [vmem:[%s776] ss:$9 sm:$0xff] %v744
        %816 = vst [vmem:[%s779] ss:$9 sm:$0xff] %v745
        %v817 = vld [vmem:[#allocation1] sm:$0xff]
        %v818 = vld [vmem:[#allocation1 + $0x9] sm:$0xff]
        %820 = vst [vmem:[#allocation1] ss:$9 sm:$0xff] %v746
        %822 = vst [vmem:[%s761] ss:$9 sm:$0xff] %v747
        %824 = vst [vmem:[%s764] ss:$9 sm:$0xff] %v748
        %826 = vst [vmem:[%s767] ss:$9 sm:$0xff] %v749
        %828 = vst [vmem:[%s770] ss:$9 sm:$0xff] %v750
        %830 = vst [vmem:[%s773] ss:$9 sm:$0xff] %v751
        %832 = vst [vmem:[%s776] ss:$9 sm:$0xff] %v752
        %834 = vst [vmem:[%s779] ss:$9 sm:$0xff] %v753
        %v835 = vld [vmem:[#allocation1] sm:$0xff]
        %v836 = vld [vmem:[#allocation1 + $0x9] sm:$0xff]
        %838 = vst [vmem:[#allocation1] ss:$9 sm:$0xff] %v754
        %840 = vst [vmem:[%s761] ss:$9 sm:$0xff] %v755
        %842 = vst [vmem:[%s764] ss:$9 sm:$0xff] %v756
        %844 = vst [vmem:[%s767] ss:$9 sm:$0xff] %v757
        %v845 = vld [vmem:[#allocation1] sm:$0xff]
        %v846 = vld [vmem:[#allocation1 + $0x9] sm:$0xff]
        %v872 = vunpack.c.l.b16 %v702
        %v873 = vunpack.c.h.b16 %v702
        %v874 = vunpack.c.l.b16 %v703
        %v875 = vunpack.c.h.b16 %v703
        %v876 = vunpack.c.l.b16 %v704
        %v877 = vunpack.c.h.b16 %v704
        %v878 = vunpack.c.l.b16 %v705
        %v879 = vunpack.c.h.b16 %v705
        %v880 = vunpack.c.l.b16 %v706
        %v881 = vunpack.c.h.b16 %v706
        %v882 = vunpack.c.l.b16 %v707
        %v883 = vunpack.c.h.b16 %v707
        %v884 = vunpack.c.l.b16 %v708
        %v885 = vunpack.c.h.b16 %v708
        %v886 = vunpack.c.l.b16 %v709
        %v887 = vunpack.c.h.b16 %v709
        %v888 = vunpack.c.l.b16 %v710
        %v889 = vunpack.c.h.b16 %v710
        %v890 = vunpack.c.l.b16 %v711
        %v891 = vunpack.c.h.b16 %v711
        %v892 = vunpack.c.l.b16 %v712
        %v893 = vunpack.c.h.b16 %v712
        %v894 = vunpack.c.l.b16 %v713
        %v895 = vunpack.c.h.b16 %v713
        %v896 = vunpack.c.l.b16 %v714
        %v897 = vunpack.c.h.b16 %v714
        %v898 = vunpack.c.l.b16 %v715
        %v899 = vunpack.c.h.b16 %v715
        %v900 = vunpack.c.l.b16 %v716
        %v901 = vunpack.c.h.b16 %v716
        %v902 = vunpack.c.l.b16 %v717
        %v903 = vunpack.c.h.b16 %v717
        %v904 = vunpack.c.l.b16 %v718
        %v905 = vunpack.c.h.b16 %v718
        %v906 = vunpack.c.l.b16 %v719
        %v907 = vunpack.c.h.b16 %v719
        %v908 = vunpack.c.l.b16 %v720
        %v909 = vunpack.c.h.b16 %v720
        %v910 = vunpack.c.l.b16 %v721
        %v911 = vunpack.c.h.b16 %v721
        %v912 = vpack.c.b16 %v874, %v872
        %v913 = vpack.c.b16 %v875, %v873
        %v914 = vpack.c.b16 %v878, %v876
        %v915 = vpack.c.b16 %v879, %v877
        %v916 = vpack.c.b16 %v882, %v880
        %v917 = vpack.c.b16 %v883, %v881
        %v918 = vpack.c.b16 %v886, %v884
        %v919 = vpack.c.b16 %v887, %v885
        %v920 = vpack.c.b16 %v890, %v888
        %v921 = vpack.c.b16 %v891, %v889
        %v922 = vpack.c.b16 %v894, %v892
        %v923 = vpack.c.b16 %v895, %v893
        %v924 = vpack.c.b16 %v898, %v896
        %v925 = vpack.c.b16 %v899, %v897
        %v926 = vpack.c.b16 %v902, %v900
        %v927 = vpack.c.b16 %v903, %v901
        %v928 = vpack.c.b16 %v906, %v904
        %v929 = vpack.c.b16 %v907, %v905
        %v930 = vpack.c.b16 %v910, %v908
        %v931 = vpack.c.b16 %v911, %v909
        %v952 = vsel %vm446, %v782, 0
        %v954 = vsel %vm446, %v800, 0
        %v956 = vsel %vm446, %v818, 0
        %v958 = vsel %vm446, %v836, 0
        %v960 = vsel %vm446, %v846, 0
        %962 = vmatpush.bf16.msra.mxu0 %v926
        %963 = vmatpush.bf16.msra.mxu0 %v924
        %964 = vmatpush.bf16.msra.mxu0 %v922
        %965 = vmatpush.bf16.msra.mxu0 %v920
        %966 = vmatpush.bf16.msra.mxu0 %v918
        %967 = vmatpush.bf16.msra.mxu0 %v916
        %968 = vmatpush.bf16.msra.mxu0 %v914
        %969 = vmatpush.bf16.msra.mxu0 %v912
        %970 = vmatmul.bf16.gmra.mxu0 %v781
        %v971 = vpop.f32.mrf.mxu0
        %v972 = vadd.f32 0.0, %v971
        %v973 = vpop.f32.mrf.mxu0
        %v974 = vadd.f32 0.0, %v973
        %975 = vmatmul.bf16.gmra.mxu0 %v799
        %v976 = vpop.f32.mrf.mxu0
        %v977 = vadd.f32 0.0, %v976
        %v978 = vpop.f32.mrf.mxu0
        %v979 = vadd.f32 0.0, %v978
        %980 = vmatmul.bf16.gmra.mxu0 %v817
        %v981 = vpop.f32.mrf.mxu0
        %v982 = vadd.f32 0.0, %v981
        %v983 = vpop.f32.mrf.mxu0
        %v984 = vadd.f32 0.0, %v983
        %985 = vmatmul.bf16.gmra.mxu0 %v835
        %v986 = vpop.f32.mrf.mxu0
        %v987 = vadd.f32 0.0, %v986
        %v988 = vpop.f32.mrf.mxu0
        %v989 = vadd.f32 0.0, %v988
        %990 = vmatmul.bf16.gmra.mxu0 %v845
        %v991 = vpop.f32.mrf.mxu0
        %v992 = vadd.f32 0.0, %v991
        %v993 = vpop.f32.mrf.mxu0
        %994 = vdwg.mxu0
        %995 = vmatpush.bf16.msra.mxu0 0
        %996 = vmatpush.bf16.msra.mxu0 0
        %997 = vmatpush.bf16.msra.mxu0 0
        %998 = vmatpush.bf16.msra.mxu0 0
        %999 = vmatpush.bf16.msra.mxu0 0
        %1000 = vmatpush.bf16.msra.mxu0 0
        %1001 = vmatpush.bf16.msra.mxu0 %v930
        %1002 = vmatpush.bf16.msra.mxu0 %v928
        %1003 = vmatmul.bf16.gmra.mxu0 %v952
        %v1004 = vpop.f32.mrf.mxu0
        %v1005 = vadd.f32 %v972, %v1004
        %v1006 = vpop.f32.mrf.mxu0
        %v1007 = vadd.f32 %v974, %v1006
        %1008 = vmatmul.bf16.gmra.mxu0 %v954
        %v1009 = vpop.f32.mrf.mxu0
        %v1010 = vadd.f32 %v977, %v1009
        %v1011 = vpop.f32.mrf.mxu0
        %v1012 = vadd.f32 %v979, %v1011
        %1013 = vmatmul.bf16.gmra.mxu0 %v956
        %v1014 = vpop.f32.mrf.mxu0
        %v1015 = vadd.f32 %v982, %v1014
        %v1016 = vpop.f32.mrf.mxu0
        %v1017 = vadd.f32 %v984, %v1016
        %1018 = vmatmul.bf16.gmra.mxu0 %v958
        %v1019 = vpop.f32.mrf.mxu0
        %v1020 = vadd.f32 %v987, %v1019
        %v1021 = vpop.f32.mrf.mxu0
        %v1022 = vadd.f32 %v989, %v1021
        %1023 = vmatmul.bf16.gmra.mxu0 %v960
        %v1024 = vpop.f32.mrf.mxu0
        %v1025 = vadd.f32 %v992, %v1024
        %v1026 = vpop.f32.mrf.mxu0
        %1027 = vdwg.mxu0
        %1028 = vmatpush.bf16.msra.mxu0 %v927
        %1029 = vmatpush.bf16.msra.mxu0 %v925
        %1030 = vmatpush.bf16.msra.mxu0 %v923
        %1031 = vmatpush.bf16.msra.mxu0 %v921
        %1032 = vmatpush.bf16.msra.mxu0 %v919
        %1033 = vmatpush.bf16.msra.mxu0 %v917
        %1034 = vmatpush.bf16.msra.mxu0 %v915
        %1035 = vmatpush.bf16.msra.mxu0 %v913
        %1036 = vmatmul.bf16.gmra.mxu0 %v781
        %v1037 = vpop.f32.mrf.mxu0
        %v1038 = vadd.f32 0.0, %v1037
        %v1039 = vpop.f32.mrf.mxu0
        %v1040 = vadd.f32 0.0, %v1039
        %1041 = vmatmul.bf16.gmra.mxu0 %v799
        %v1042 = vpop.f32.mrf.mxu0
        %v1043 = vadd.f32 0.0, %v1042
        %v1044 = vpop.f32.mrf.mxu0
        %v1045 = vadd.f32 0.0, %v1044
        %1046 = vmatmul.bf16.gmra.mxu0 %v817
        %v1047 = vpop.f32.mrf.mxu0
        %v1048 = vadd.f32 0.0, %v1047
        %v1049 = vpop.f32.mrf.mxu0
        %v1050 = vadd.f32 0.0, %v1049
        %1051 = vmatmul.bf16.gmra.mxu0 %v835
        %v1052 = vpop.f32.mrf.mxu0
        %v1053 = vadd.f32 0.0, %v1052
        %v1054 = vpop.f32.mrf.mxu0
        %v1055 = vadd.f32 0.0, %v1054
        %1056 = vmatmul.bf16.gmra.mxu0 %v845
        %v1057 = vpop.f32.mrf.mxu0
        %v1058 = vadd.f32 0.0, %v1057
        %v1059 = vpop.f32.mrf.mxu0
        %1060 = vdwg.mxu0
        %1061 = vmatpush.bf16.msra.mxu0 0
        %1062 = vmatpush.bf16.msra.mxu0 0
        %1063 = vmatpush.bf16.msra.mxu0 0
        %1064 = vmatpush.bf16.msra.mxu0 0
        %1065 = vmatpush.bf16.msra.mxu0 0
        %1066 = vmatpush.bf16.msra.mxu0 0
        %1067 = vmatpush.bf16.msra.mxu0 %v931
        %1068 = vmatpush.bf16.msra.mxu0 %v929
        %1069 = vmatmul.bf16.gmra.mxu0 %v952
        %v1070 = vpop.f32.mrf.mxu0
        %v1071 = vadd.f32 %v1038, %v1070
        %v1072 = vpop.f32.mrf.mxu0
        %v1073 = vadd.f32 %v1040, %v1072
        %1074 = vmatmul.bf16.gmra.mxu0 %v954
        %v1075 = vpop.f32.mrf.mxu0
        %v1076 = vadd.f32 %v1043, %v1075
        %v1077 = vpop.f32.mrf.mxu0
        %v1078 = vadd.f32 %v1045, %v1077
        %1079 = vmatmul.bf16.gmra.mxu0 %v956
        %v1080 = vpop.f32.mrf.mxu0
        %v1081 = vadd.f32 %v1048, %v1080
        %v1082 = vpop.f32.mrf.mxu0
        %v1083 = vadd.f32 %v1050, %v1082
        %1084 = vmatmul.bf16.gmra.mxu0 %v958
        %v1085 = vpop.f32.mrf.mxu0
        %v1086 = vadd.f32 %v1053, %v1085
        %v1087 = vpop.f32.mrf.mxu0
        %v1088 = vadd.f32 %v1055, %v1087
        %1089 = vmatmul.bf16.gmra.mxu0 %v960
        %v1090 = vpop.f32.mrf.mxu0
        %v1091 = vadd.f32 %v1058, %v1090
        %v1092 = vpop.f32.mrf.mxu0
        %1093 = vdwg.mxu0
        %v1112 = vrot.slane %v1071, 7
        %v1113 = vrot.slane %v1073, 7
        %v1114 = vrot.slane %v1076, 7
        %v1115 = vrot.slane %v1078, 7
        %v1116 = vrot.slane %v1081, 7
        %v1117 = vrot.slane %v1083, 7
        %v1118 = vrot.slane %v1086, 7
        %v1119 = vrot.slane %v1088, 7
        %v1120 = vrot.slane %v1091, 7
        %v1121 = vsel %vm505, %v1005, %v1112
        %v1122 = vsel %vm509, %v1005, %v1112
        %v1123 = vrot.slane %v1122, 1
        %v1124 = vsel %vm513, %v1005, %v1112
        %v1125 = vrot.slane %v1124, 2
        %v1126 = vsel %vm517, %v1005, %v1112
        %v1127 = vrot.slane %v1126, 3
        %v1128 = vsel %vm521, %v1005, %v1112
        %v1129 = vrot.slane %v1128, 4
        %vm1130 = vcmask 1045509
        %v1131 = vsel %vm1130, %v1005, %v1112
        %v1132 = vrot.slane %v1131, 5
        %vm1133 = vcmask 1046534
        %v1134 = vsel %vm1133, %v1005, %v1112
        %v1135 = vrot.slane %v1134, 6
        %vm1136 = vcmask 1046528
        %v1137 = vsel %vm1136, %v1112, %v1005
        %v1138 = vrot.slane %v1137, 7
        %v1139 = vsel %vm505, %v1007, %v1113
        %v1140 = vsel %vm509, %v1007, %v1113
        %v1141 = vrot.slane %v1140, 1
        %v1142 = vsel %vm513, %v1007, %v1113
        %v1143 = vrot.slane %v1142, 2
        %v1144 = vsel %vm517, %v1007, %v1113
        %v1145 = vrot.slane %v1144, 3
        %v1146 = vsel %vm521, %v1007, %v1113
        %v1147 = vrot.slane %v1146, 4
        %v1148 = vsel %vm1130, %v1007, %v1113
        %v1149 = vrot.slane %v1148, 5
        %v1150 = vsel %vm1133, %v1007, %v1113
        %v1151 = vrot.slane %v1150, 6
        %v1152 = vsel %vm1136, %v1113, %v1007
        %v1153 = vrot.slane %v1152, 7
        %v1154 = vsel %vm505, %v1010, %v1114
        %v1155 = vsel %vm509, %v1010, %v1114
        %v1156 = vrot.slane %v1155, 1
        %v1157 = vsel %vm513, %v1010, %v1114
        %v1158 = vrot.slane %v1157, 2
        %v1159 = vsel %vm517, %v1010, %v1114
        %v1160 = vrot.slane %v1159, 3
        %v1161 = vsel %vm521, %v1010, %v1114
        %v1162 = vrot.slane %v1161, 4
        %v1163 = vsel %vm1130, %v1010, %v1114
        %v1164 = vrot.slane %v1163, 5
        %v1165 = vsel %vm1133, %v1010, %v1114
        %v1166 = vrot.slane %v1165, 6
        %v1167 = vsel %vm1136, %v1114, %v1010
        %v1168 = vrot.slane %v1167, 7
        %v1169 = vsel %vm505, %v1012, %v1115
        %v1170 = vsel %vm509, %v1012, %v1115
        %v1171 = vrot.slane %v1170, 1
        %v1172 = vsel %vm513, %v1012, %v1115
        %v1173 = vrot.slane %v1172, 2
        %v1174 = vsel %vm517, %v1012, %v1115
        %v1175 = vrot.slane %v1174, 3
        %v1176 = vsel %vm521, %v1012, %v1115
        %v1177 = vrot.slane %v1176, 4
        %v1178 = vsel %vm1130, %v1012, %v1115
        %v1179 = vrot.slane %v1178, 5
        %v1180 = vsel %vm1133, %v1012, %v1115
        %v1181 = vrot.slane %v1180, 6
        %v1182 = vsel %vm1136, %v1115, %v1012
        %v1183 = vrot.slane %v1182, 7
        %v1184 = vsel %vm505, %v1015, %v1116
        %v1185 = vsel %vm509, %v1015, %v1116
        %v1186 = vrot.slane %v1185, 1
        %v1187 = vsel %vm513, %v1015, %v1116
        %v1188 = vrot.slane %v1187, 2
        %v1189 = vsel %vm517, %v1015, %v1116
        %v1190 = vrot.slane %v1189, 3
        %v1191 = vsel %vm521, %v1015, %v1116
        %v1192 = vrot.slane %v1191, 4
        %v1193 = vsel %vm1130, %v1015, %v1116
        %v1194 = vrot.slane %v1193, 5
        %v1195 = vsel %vm1133, %v1015, %v1116
        %v1196 = vrot.slane %v1195, 6
        %v1197 = vsel %vm1136, %v1116, %v1015
        %v1198 = vrot.slane %v1197, 7
        %v1199 = vsel %vm505, %v1017, %v1117
        %v1200 = vsel %vm509, %v1017, %v1117
        %v1201 = vrot.slane %v1200, 1
        %v1202 = vsel %vm513, %v1017, %v1117
        %v1203 = vrot.slane %v1202, 2
        %v1204 = vsel %vm517, %v1017, %v1117
        %v1205 = vrot.slane %v1204, 3
        %v1206 = vsel %vm521, %v1017, %v1117
        %v1207 = vrot.slane %v1206, 4
        %v1208 = vsel %vm1130, %v1017, %v1117
        %v1209 = vrot.slane %v1208, 5
        %v1210 = vsel %vm1133, %v1017, %v1117
        %v1211 = vrot.slane %v1210, 6
        %v1212 = vsel %vm1136, %v1117, %v1017
        %v1213 = vrot.slane %v1212, 7
        %v1214 = vsel %vm505, %v1020, %v1118
        %v1215 = vsel %vm509, %v1020, %v1118
        %v1216 = vrot.slane %v1215, 1
        %v1217 = vsel %vm513, %v1020, %v1118
        %v1218 = vrot.slane %v1217, 2
        %v1219 = vsel %vm517, %v1020, %v1118
        %v1220 = vrot.slane %v1219, 3
        %v1221 = vsel %vm521, %v1020, %v1118
        %v1222 = vrot.slane %v1221, 4
        %v1223 = vsel %vm1130, %v1020, %v1118
        %v1224 = vrot.slane %v1223, 5
        %v1225 = vsel %vm1133, %v1020, %v1118
        %v1226 = vrot.slane %v1225, 6
        %v1227 = vsel %vm1136, %v1118, %v1020
        %v1228 = vrot.slane %v1227, 7
        %v1229 = vsel %vm505, %v1022, %v1119
        %v1230 = vsel %vm509, %v1022, %v1119
        %v1231 = vrot.slane %v1230, 1
        %v1232 = vsel %vm513, %v1022, %v1119
        %v1233 = vrot.slane %v1232, 2
        %v1234 = vsel %vm517, %v1022, %v1119
        %v1235 = vrot.slane %v1234, 3
        %v1236 = vsel %vm521, %v1022, %v1119
        %v1237 = vrot.slane %v1236, 4
        %v1238 = vsel %vm1130, %v1022, %v1119
        %v1239 = vrot.slane %v1238, 5
        %v1240 = vsel %vm1133, %v1022, %v1119
        %v1241 = vrot.slane %v1240, 6
        %v1242 = vsel %vm1136, %v1119, %v1022
        %v1243 = vrot.slane %v1242, 7
        %v1244 = vsel %vm505, %v1025, %v1120
        %v1245 = vsel %vm509, %v1025, %v1120
        %v1246 = vrot.slane %v1245, 1
        %v1247 = vsel %vm513, %v1025, %v1120
        %v1248 = vrot.slane %v1247, 2
        %v1249 = vsel %vm517, %v1025, %v1120
        %v1250 = vrot.slane %v1249, 3
        %v1251 = vsel %vm521, %v1025, %v1120
        %v1252 = vrot.slane %v1251, 4
        %v1253 = vsel %vm1130, %v1025, %v1120
        %v1254 = vrot.slane %v1253, 5
        %v1255 = vsel %vm1133, %v1025, %v1120
        %v1256 = vrot.slane %v1255, 6
        %v1257 = vsel %vm1136, %v1120, %v1025
        %v1258 = vrot.slane %v1257, 7
        %1259 = vst [vmem:[#allocation1] ss:$9 sm:$0xff] %v1121
        %s1260 = scalar_lea.vmem [#allocation1], 1
        %1261 = vst [vmem:[%s1260] ss:$9 sm:$0xff] %v1123
        %s1262 = scalar_lea.vmem [#allocation1], 2
        %1263 = vst [vmem:[%s1262] ss:$9 sm:$0xff] %v1125
        %s1264 = scalar_lea.vmem [#allocation1], 3
        %1265 = vst [vmem:[%s1264] ss:$9 sm:$0xff] %v1127
        %s1266 = scalar_lea.vmem [#allocation1], 4
        %1267 = vst [vmem:[%s1266] ss:$9 sm:$0xff] %v1129
        %s1268 = scalar_lea.vmem [#allocation1], 5
        %1269 = vst [vmem:[%s1268] ss:$9 sm:$0xff] %v1132
        %s1270 = scalar_lea.vmem [#allocation1], 6
        %1271 = vst [vmem:[%s1270] ss:$9 sm:$0xff] %v1135
        %s1272 = scalar_lea.vmem [#allocation1], 7
        %1273 = vst [vmem:[%s1272] ss:$9 sm:$0xff] %v1138
        %v1274 = vld [vmem:[#allocation1] sm:$0xff]
        %v1275 = vld [vmem:[#allocation1 + $0x9] sm:$0xff]
        %1276 = vst [vmem:[#allocation1] ss:$9 sm:$0xff] %v1141
        %1277 = vst [vmem:[%s1260] ss:$9 sm:$0xff] %v1143
        %1278 = vst [vmem:[%s1262] ss:$9 sm:$0xff] %v1145
        %1279 = vst [vmem:[%s1264] ss:$9 sm:$0xff] %v1147
        %1280 = vst [vmem:[%s1266] ss:$9 sm:$0xff] %v1149
        %1281 = vst [vmem:[%s1268] ss:$9 sm:$0xff] %v1151
        %1282 = vst [vmem:[%s1270] ss:$9 sm:$0xff] %v1153
        %1283 = vst [vmem:[%s1272] ss:$9 sm:$0xff] %v1154
        %v1284 = vld [vmem:[#allocation1] sm:$0xff]
        %v1285 = vld [vmem:[#allocation1 + $0x9] sm:$0xff]
        %1286 = vst [vmem:[#allocation1] ss:$9 sm:$0xff] %v1158
        %1287 = vst [vmem:[%s1260] ss:$9 sm:$0xff] %v1160
        %1288 = vst [vmem:[%s1262] ss:$9 sm:$0xff] %v1162
        %1289 = vst [vmem:[%s1264] ss:$9 sm:$0xff] %v1164
        %1290 = vst [vmem:[%s1266] ss:$9 sm:$0xff] %v1166
        %1291 = vst [vmem:[%s1268] ss:$9 sm:$0xff] %v1168
        %1292 = vst [vmem:[%s1270] ss:$9 sm:$0xff] %v1169
        %1293 = vst [vmem:[%s1272] ss:$9 sm:$0xff] %v1171
        %v1294 = vld [vmem:[#allocation1] sm:$0xff]
        %v1295 = vld [vmem:[#allocation1 + $0x9] sm:$0xff]
        %1296 = vst [vmem:[#allocation1] ss:$9 sm:$0xff] %v1175
        %1297 = vst [vmem:[%s1260] ss:$9 sm:$0xff] %v1177
        %1298 = vst [vmem:[%s1262] ss:$9 sm:$0xff] %v1179
        %1299 = vst [vmem:[%s1264] ss:$9 sm:$0xff] %v1181
        %1300 = vst [vmem:[%s1266] ss:$9 sm:$0xff] %v1183
        %1301 = vst [vmem:[%s1268] ss:$9 sm:$0xff] %v1184
        %1302 = vst [vmem:[%s1270] ss:$9 sm:$0xff] %v1186
        %1303 = vst [vmem:[%s1272] ss:$9 sm:$0xff] %v1188
        %v1304 = vld [vmem:[#allocation1] sm:$0xff]
        %v1305 = vld [vmem:[#allocation1 + $0x9] sm:$0xff]
        %1306 = vst [vmem:[#allocation1] ss:$9 sm:$0xff] %v1192
        %1307 = vst [vmem:[%s1260] ss:$9 sm:$0xff] %v1194
        %1308 = vst [vmem:[%s1262] ss:$9 sm:$0xff] %v1196
        %1309 = vst [vmem:[%s1264] ss:$9 sm:$0xff] %v1198
        %1310 = vst [vmem:[%s1266] ss:$9 sm:$0xff] %v1199
        %1311 = vst [vmem:[%s1268] ss:$9 sm:$0xff] %v1201
        %1312 = vst [vmem:[%s1270] ss:$9 sm:$0xff] %v1203
        %1313 = vst [vmem:[%s1272] ss:$9 sm:$0xff] %v1205
        %v1314 = vld [vmem:[#allocation1] sm:$0xff]
        %v1315 = vld [vmem:[#allocation1 + $0x9] sm:$0xff]
        %1316 = vst [vmem:[#allocation1] ss:$9 sm:$0xff] %v1209
        %1317 = vst [vmem:[%s1260] ss:$9 sm:$0xff] %v1211
        %1318 = vst [vmem:[%s1262] ss:$9 sm:$0xff] %v1213
        %1319 = vst [vmem:[%s1264] ss:$9 sm:$0xff] %v1214
        %1320 = vst [vmem:[%s1266] ss:$9 sm:$0xff] %v1216
        %1321 = vst [vmem:[%s1268] ss:$9 sm:$0xff] %v1218
        %1322 = vst [vmem:[%s1270] ss:$9 sm:$0xff] %v1220
        %1323 = vst [vmem:[%s1272] ss:$9 sm:$0xff] %v1222
        %v1324 = vld [vmem:[#allocation1] sm:$0xff]
        %v1325 = vld [vmem:[#allocation1 + $0x9] sm:$0xff]
        %1326 = vst [vmem:[#allocation1] ss:$9 sm:$0xff] %v1226
        %1327 = vst [vmem:[%s1260] ss:$9 sm:$0xff] %v1228
        %1328 = vst [vmem:[%s1262] ss:$9 sm:$0xff] %v1229
        %1329 = vst [vmem:[%s1264] ss:$9 sm:$0xff] %v1231
        %1330 = vst [vmem:[%s1266] ss:$9 sm:$0xff] %v1233
        %1331 = vst [vmem:[%s1268] ss:$9 sm:$0xff] %v1235
        %1332 = vst [vmem:[%s1270] ss:$9 sm:$0xff] %v1237
        %1333 = vst [vmem:[%s1272] ss:$9 sm:$0xff] %v1239
        %v1334 = vld [vmem:[#allocation1] sm:$0xff]
        %v1335 = vld [vmem:[#allocation1 + $0x9] sm:$0xff]
        %1336 = vst [vmem:[#allocation1] ss:$9 sm:$0xff] %v1243
        %1337 = vst [vmem:[%s1260] ss:$9 sm:$0xff] %v1244
        %1338 = vst [vmem:[%s1262] ss:$9 sm:$0xff] %v1246
        %1339 = vst [vmem:[%s1264] ss:$9 sm:$0xff] %v1248
        %1340 = vst [vmem:[%s1266] ss:$9 sm:$0xff] %v1250
        %1341 = vst [vmem:[%s1268] ss:$9 sm:$0xff] %v1252
        %1342 = vst [vmem:[%s1270] ss:$9 sm:$0xff] %v1254
        %1343 = vst [vmem:[%s1272] ss:$9 sm:$0xff] %v1256
        %v1344 = vld [vmem:[#allocation1] sm:$0xff]
        %v1345 = vld [vmem:[#allocation1 + $0x9] sm:$0xff]
        %v1362 = vrot.slane %v1274, 4
        %v1363 = vmax.f32 %v1274, %v1362
        %v1364 = vrot.slane %v1363, 2
        %v1365 = vmax.f32 %v1363, %v1364
        %v1366 = vrot.slane %v1365, 1
        %v1367 = vmax.f32 %v1365, %v1366
        %v1368 = vrot.slane %v1275, 4
        %v1369 = vmax.f32 %v1275, %v1368
        %v1370 = vrot.slane %v1369, 2
        %v1371 = vmax.f32 %v1369, %v1370
        %v1372 = vrot.slane %v1371, 1
        %v1373 = vmax.f32 %v1371, %v1372
        %v1374 = vrot.slane %v1284, 4
        %v1375 = vmax.f32 %v1284, %v1374
        %v1376 = vrot.slane %v1375, 2
        %v1377 = vmax.f32 %v1375, %v1376
        %v1378 = vrot.slane %v1377, 1
        %v1379 = vmax.f32 %v1377, %v1378
        %v1380 = vrot.slane %v1285, 4
        %v1381 = vmax.f32 %v1285, %v1380
        %v1382 = vrot.slane %v1381, 2
        %v1383 = vmax.f32 %v1381, %v1382
        %v1384 = vrot.slane %v1383, 1
        %v1385 = vmax.f32 %v1383, %v1384
        %v1386 = vrot.slane %v1294, 4
        %v1387 = vmax.f32 %v1294, %v1386
        %v1388 = vrot.slane %v1387, 2
        %v1389 = vmax.f32 %v1387, %v1388
        %v1390 = vrot.slane %v1389, 1
        %v1391 = vmax.f32 %v1389, %v1390
        %v1392 = vrot.slane %v1295, 4
        %v1393 = vmax.f32 %v1295, %v1392
        %v1394 = vrot.slane %v1393, 2
        %v1395 = vmax.f32 %v1393, %v1394
        %v1396 = vrot.slane %v1395, 1
        %v1397 = vmax.f32 %v1395, %v1396
        %v1398 = vrot.slane %v1304, 4
        %v1399 = vmax.f32 %v1304, %v1398
        %v1400 = vrot.slane %v1399, 2
        %v1401 = vmax.f32 %v1399, %v1400
        %v1402 = vrot.slane %v1401, 1
        %v1403 = vmax.f32 %v1401, %v1402
        %v1404 = vrot.slane %v1305, 4
        %v1405 = vmax.f32 %v1305, %v1404
        %v1406 = vrot.slane %v1405, 2
        %v1407 = vmax.f32 %v1405, %v1406
        %v1408 = vrot.slane %v1407, 1
        %v1409 = vmax.f32 %v1407, %v1408
        %v1410 = vrot.slane %v1314, 4
        %v1411 = vmax.f32 %v1314, %v1410
        %v1412 = vrot.slane %v1411, 2
        %v1413 = vmax.f32 %v1411, %v1412
        %v1414 = vrot.slane %v1413, 1
        %v1415 = vmax.f32 %v1413, %v1414
        %v1416 = vrot.slane %v1315, 4
        %v1417 = vmax.f32 %v1315, %v1416
        %v1418 = vrot.slane %v1417, 2
        %v1419 = vmax.f32 %v1417, %v1418
        %v1420 = vrot.slane %v1419, 1
        %v1421 = vmax.f32 %v1419, %v1420
        %v1422 = vrot.slane %v1324, 4
        %v1423 = vmax.f32 %v1324, %v1422
        %v1424 = vrot.slane %v1423, 2
        %v1425 = vmax.f32 %v1423, %v1424
        %v1426 = vrot.slane %v1425, 1
        %v1427 = vmax.f32 %v1425, %v1426
        %v1428 = vrot.slane %v1325, 4
        %v1429 = vmax.f32 %v1325, %v1428
        %v1430 = vrot.slane %v1429, 2
        %v1431 = vmax.f32 %v1429, %v1430
        %v1432 = vrot.slane %v1431, 1
        %v1433 = vmax.f32 %v1431, %v1432
        %v1434 = vrot.slane %v1334, 4
        %v1435 = vmax.f32 %v1334, %v1434
        %v1436 = vrot.slane %v1435, 2
        %v1437 = vmax.f32 %v1435, %v1436
        %v1438 = vrot.slane %v1437, 1
        %v1439 = vmax.f32 %v1437, %v1438
        %v1440 = vrot.slane %v1335, 4
        %v1441 = vmax.f32 %v1335, %v1440
        %v1442 = vrot.slane %v1441, 2
        %v1443 = vmax.f32 %v1441, %v1442
        %v1444 = vrot.slane %v1443, 1
        %v1445 = vmax.f32 %v1443, %v1444
        %v1446 = vrot.slane %v1344, 4
        %v1447 = vmax.f32 %v1344, %v1446
        %v1448 = vrot.slane %v1447, 2
        %v1449 = vmax.f32 %v1447, %v1448
        %v1450 = vrot.slane %v1449, 1
        %v1451 = vmax.f32 %v1449, %v1450
        %v1452 = vrot.slane %v1345, 4
        %v1453 = vmax.f32 %v1345, %v1452
        %v1454 = vrot.slane %v1453, 2
        %v1455 = vmax.f32 %v1453, %v1454
        %v1456 = vrot.slane %v1455, 1
        %v1457 = vmax.f32 %v1455, %v1456
        %v1458 = vlaneseq
        %v1459 = vand.u32 %v1458, 127
        %v1460 = vadd.s32 %v1459, 128
        %vm1461 = vcmp.ge.s32.totalorder %v1459, 64
        %vm1462 = vcmp.ge.s32.totalorder %v1460, 64
        %vm1463 = vcmp.lt.s32.totalorder %v1459, 128
        %vm1464 = vcmp.lt.s32.totalorder %v1460, 128
        %vm1465 = vmand %vm1461, %vm1463
        %vm1466 = vmand %vm1462, %vm1464
        %v1467 = vperm.slane %v1139, 0
        %v1468 = vperm.slane %v1139, 1
        %v1469 = vperm.slane %v1156, 0
        %v1470 = vperm.slane %v1156, 1
        %v1471 = vperm.slane %v1173, 0
        %v1472 = vperm.slane %v1173, 1
        %v1473 = vperm.slane %v1190, 0
        %v1474 = vperm.slane %v1190, 1
        %v1475 = vperm.slane %v1207, 0
        %v1476 = vperm.slane %v1207, 1
        %v1477 = vperm.slane %v1224, 0
        %v1478 = vperm.slane %v1224, 1
        %v1479 = vperm.slane %v1241, 0
        %v1480 = vperm.slane %v1241, 1
        %v1481 = vperm.slane %v1258, 0
        %v1482 = vperm.slane %v1258, 1
        %v1499 = vmax.f32 %v1367, %v1467
        %v1500 = vmax.f32 %v1373, %v1468
        %v1501 = vmax.f32 %v1379, %v1469
        %v1502 = vmax.f32 %v1385, %v1470
        %v1503 = vmax.f32 %v1391, %v1471
        %v1504 = vmax.f32 %v1397, %v1472
        %v1505 = vmax.f32 %v1403, %v1473
        %v1506 = vmax.f32 %v1409, %v1474
        %v1507 = vmax.f32 %v1415, %v1475
        %v1508 = vmax.f32 %v1421, %v1476
        %v1509 = vmax.f32 %v1427, %v1477
        %v1510 = vmax.f32 %v1433, %v1478
        %v1511 = vmax.f32 %v1439, %v1479
        %v1512 = vmax.f32 %v1445, %v1480
        %v1513 = vmax.f32 %v1451, %v1481
        %v1514 = vmax.f32 %v1457, %v1482
        %v1515 = vsel %vm1465, 1, 0
        %v1516 = vsel %vm1466, 1, 0
        %vm1517 = vcmp.eq.s32.totalorder %v1515, 1
        %vm1518 = vcmp.eq.s32.totalorder %v1516, 1
        %v1535 = vrot.slane %v1501, 7
        %v1536 = vsel %vm509, %v1535, %v1499
        %v1537 = vrot.slane %v1503, 6
        %v1538 = vsel %vm513, %v1537, %v1536
        %v1539 = vrot.slane %v1505, 5
        %v1540 = vsel %vm517, %v1539, %v1538
        %v1541 = vrot.slane %v1507, 4
        %v1542 = vsel %vm521, %v1541, %v1540
        %v1543 = vrot.slane %v1509, 3
        %v1544 = vsel %vm1130, %v1543, %v1542
        %v1545 = vrot.slane %v1511, 2
        %v1546 = vsel %vm1133, %v1545, %v1544
        %v1547 = vrot.slane %v1513, 1
        %vm1548 = vcmask 1047559
        %v1549 = vsel %vm1548, %v1547, %v1546
        %v1550 = vrot.slane %v1502, 7
        %v1551 = vsel %vm509, %v1550, %v1500
        %v1552 = vrot.slane %v1504, 6
        %v1553 = vsel %vm513, %v1552, %v1551
        %v1554 = vrot.slane %v1506, 5
        %v1555 = vsel %vm517, %v1554, %v1553
        %v1556 = vrot.slane %v1508, 4
        %v1557 = vsel %vm521, %v1556, %v1555
        %v1558 = vrot.slane %v1510, 3
        %v1559 = vsel %vm1130, %v1558, %v1557
        %v1560 = vrot.slane %v1512, 2
        %v1561 = vsel %vm1133, %v1560, %v1559
        %v1562 = vrot.slane %v1514, 1
        %v1563 = vsel %vm1548, %v1562, %v1561
        %v1582 = vsel %vm509, %v1379, %v1367
        %v1583 = vsel %vm513, %v1391, %v1582
        %v1584 = vsel %vm517, %v1403, %v1583
        %v1585 = vsel %vm521, %v1415, %v1584
        %v1586 = vsel %vm1130, %v1427, %v1585
        %v1587 = vsel %vm1133, %v1439, %v1586
        %v1588 = vsel %vm1548, %v1451, %v1587
        %v1589 = vsel %vm509, %v1385, %v1373
        %v1590 = vsel %vm513, %v1397, %v1589
        %v1591 = vsel %vm517, %v1409, %v1590
        %v1592 = vsel %vm521, %v1421, %v1591
        %v1593 = vsel %vm1130, %v1433, %v1592
        %v1594 = vsel %vm1133, %v1445, %v1593
        %v1595 = vsel %vm1548, %v1457, %v1594
        %v1598 = vsel %vm1517, %v1549, %v1588
        %v1599 = vsel %vm1518, %v1563, %v1595
        %v1600 = vld [vmem:[%s2] sm:$0x3]
        %v1602 = vperm.slane %v1600, 0
        %v1603 = vperm.slane %v1600, 1
        %v1606 = vadd.f32 %v1598, %v1602
        %v1607 = vadd.f32 %v1599, %v1603
        %v1608 = vmax.f32 %v1606, 0.0
        %v1609 = vmax.f32 %v1607, 0.0
        %v1610 = vld [vmem:[#allocation2] sm:$0xff]
        %v1611 = vld [vmem:[#allocation2 + $0x8] sm:$0xff]
        %v1612 = vld [vmem:[#allocation2 + $0x10] sm:$0xff]
        %v1613 = vld [vmem:[#allocation2 + $0x18] sm:$0xff]
        %v1614 = vld [vmem:[#allocation2 + $0x20] sm:$0xff]
        %v1615 = vld [vmem:[#allocation2 + $0x28] sm:$0xff]
        %v1616 = vld [vmem:[#allocation2 + $0x30] sm:$0xff]
        %v1617 = vld [vmem:[#allocation2 + $0x38] sm:$0xff]
        %v1618 = vld [vmem:[#allocation2 + $0x40] sm:$0xff]
        %v1619 = vld [vmem:[#allocation2 + $0x48] sm:$0xff]
        %v1620 = vld [vmem:[#allocation2 + $0x50] sm:$0xff]
        %v1621 = vld [vmem:[#allocation2 + $0x58] sm:$0xff]
        %v1622 = vld [vmem:[#allocation2 + $0x60] sm:$0xff]
        %v1623 = vld [vmem:[#allocation2 + $0x68] sm:$0xff]
        %v1624 = vld [vmem:[#allocation2 + $0x70] sm:$0xff]
        %v1625 = vld [vmem:[#allocation2 + $0x78] sm:$0xff]
        %v1626 = vld [vmem:[#allocation2 + $0x80] sm:$0xff]
        %v1627 = vld [vmem:[#allocation2 + $0x88] sm:$0xff]
        %v1628 = vld [vmem:[#allocation2 + $0x90] sm:$0xff]
        %v1629 = vld [vmem:[#allocation2 + $0x98] sm:$0xff]
        %v1630 = vld [vmem:[#allocation2 + $0xa0] sm:$0xff]
        %v1631 = vld [vmem:[#allocation2 + $0xa8] sm:$0xff]
        %v1632 = vld [vmem:[#allocation2 + $0xb0] sm:$0xff]
        %v1633 = vld [vmem:[#allocation2 + $0xb8] sm:$0xff]
        %v1634 = vld [vmem:[#allocation2 + $0xc0] sm:$0xff]
        %v1635 = vld [vmem:[#allocation2 + $0xc8] sm:$0xff]
        %v1636 = vld [vmem:[#allocation2 + $0xd0] sm:$0xff]
        %v1637 = vld [vmem:[#allocation2 + $0xd8] sm:$0xff]
        %v1638 = vld [vmem:[#allocation2 + $0xe0] sm:$0xff]
        %v1639 = vld [vmem:[#allocation2 + $0xe8] sm:$0xff]
        %v1640 = vld [vmem:[#allocation2 + $0xf0] sm:$0xff]
        %v1641 = vld [vmem:[#allocation2 + $0xf8] sm:$0xff]
        %v1642 = vld [vmem:[%s4] sm:$0x1]
        %v1644 = vperm.slane %v1642, 0
        %1646 = vmatpush.msra.mxu0 %v1625
        %1647 = vmatpush.msra.mxu0 %v1624
        %1648 = vmatpush.msra.mxu0 %v1623
        %1649 = vmatpush.msra.mxu0 %v1622
        %1650 = vmatpush.msra.mxu0 %v1621
        %1651 = vmatpush.msra.mxu0 %v1620
        %1652 = vmatpush.msra.mxu0 %v1619
        %1653 = vmatpush.msra.mxu0 %v1618
        %1654 = vmatpush.msra.mxu0 %v1617
        %1655 = vmatpush.msra.mxu0 %v1616
        %1656 = vmatpush.msra.mxu0 %v1615
        %1657 = vmatpush.msra.mxu0 %v1614
        %1658 = vmatpush.msra.mxu0 %v1613
        %1659 = vmatpush.msra.mxu0 %v1612
        %1660 = vmatpush.msra.mxu0 %v1611
        %1661 = vmatpush.msra.mxu0 %v1610
        %1662 = vmatmul.f32.gmra.mxu0 %v1608
        %v1663 = vpop.f32.mrf.mxu0
        %v1664 = vadd.f32 %v1644, %v1663
        %1665 = vdwg.mxu0
        %1666 = vmatpush.msra.mxu0 %v1641
        %1667 = vmatpush.msra.mxu0 %v1640
        %1668 = vmatpush.msra.mxu0 %v1639
        %1669 = vmatpush.msra.mxu0 %v1638
        %1670 = vmatpush.msra.mxu0 %v1637
        %1671 = vmatpush.msra.mxu0 %v1636
        %1672 = vmatpush.msra.mxu0 %v1635
        %1673 = vmatpush.msra.mxu0 %v1634
        %1674 = vmatpush.msra.mxu0 %v1633
        %1675 = vmatpush.msra.mxu0 %v1632
        %1676 = vmatpush.msra.mxu0 %v1631
        %1677 = vmatpush.msra.mxu0 %v1630
        %1678 = vmatpush.msra.mxu0 %v1629
        %1679 = vmatpush.msra.mxu0 %v1628
        %1680 = vmatpush.msra.mxu0 %v1627
        %1681 = vmatpush.msra.mxu0 %v1626
        %1682 = vmatmul.f32.gmra.mxu0 %v1609
        %v1683 = vpop.f32.mrf.mxu0
        %v1684 = vadd.f32 %v1664, %v1683
        %1685 = vdwg.mxu0
        %1686 = vst [vmem:[%s237] sm:$0xff] %v1684
        %s1687 = sand.u32 %s138, 1
        %s1688 = scalar_lea.sflag [#allocation4], %s1687
        %s1689 = sand.u32 %s138, 1
        %s1690 = smul.addr %s1689, 8
        %s1691 = scalar_lea.vmem [#allocation5], %s1690
        // Predicated region
        $region45: #{tpu_custom_call.1} parent=39 // pred_check
          %p1692 = pneg %p148
        $region46: #{tpu_custom_call.1} parent=39 // pred_check_branch
          %1694 = sbr.rel (%p1692) target = $region48
        $region47: #{tpu_custom_call.1} parent=39 // pred_region
          %1696 = vsyncadd %s1688, 0
          %s1697 = smul.addr %s20, 8
          %s1698 = scalar_lea.hbm %s5, %s1697
          %s1700 = sshll.u32 %s1691, 4
          %s1701 = int_to_ptr.vmem [resolvable:$true] %s1700
          %s1702 = sshll.u32 %s1698, 4
          %s1703 = int_to_ptr.hbm [resolvable:$true] %s1702
          %1705 = dma.vmem_to_hbm [thread:$0]  %s1701, 128, %s1703, %s1688
        $region48: #{tpu_custom_call.1} parent=39 // pred_fallthru
          _
      $region40: #{tpu_custom_call.1} parent=5 // pred_fallthru
        _
      %p1706 = scmp.le.s32.totalorder 2, %s15
      // Predicated region
      $region49: #{tpu_custom_call.1} parent=5 // pred_check
        %p1707 = pneg %p1706
      $region50: #{tpu_custom_call.1} parent=5 // pred_check_branch
        %1709 = sbr.rel (%p1707) target = $region52
      $region51: #{tpu_custom_call.1} parent=5 // pred_region
        %s1710 = ssub.s32 %s15, 2
        // Predicated region
        $region53: #{tpu_custom_call.1} parent=51 // pred_check
          %p1711 = pneg %p154
        $region54: #{tpu_custom_call.1} parent=51 // pred_check_branch
          %1713 = sbr.rel (%p1711) target = $region56
        $region55: #{tpu_custom_call.1} parent=51 // pred_region
          %s1714 = sand.u32 %s139, 1
          %s1715 = scalar_lea.sflag [#allocation4], %s1714
          %s1716 = sand.u32 %s139, 1
          %s1717 = smul.addr %s1716, 8
          %s1718 = scalar_lea.vmem [#allocation5], %s1717
          %1720 = dma.done %s1715, 128
        $region56: #{tpu_custom_call.1} parent=51 // pred_fallthru
          _
      $region52: #{tpu_custom_call.1} parent=5 // pred_fallthru
        _
    $region6: #{tpu_custom_call.1} parent=1 // loop_footer
      %s19 = sadd.s32 1, %s15
    $region7: #{tpu_custom_call.1} parent=1 // loop_footer_branch
      %14 = sbr.rel target = $region3
    $region8: #{tpu_custom_call.1} parent=1 // loop_exit
      _
    %1721 = vsyncpa [#allocation3], 1
    %s1722 = scalar_lea.sflag [#allocation3], 1
    %1723 = vsyncpa %s1722, 1
    %1724 = vsyncpa [#allocation4], 1
    %s1725 = scalar_lea.sflag [#allocation4], 1
    %1726 = vsyncpa %s1725, 1

</llo_original>
